<compile_context>
chip_gen: v7x
topology: tpu7x:2x2x1
jax: 0.10.0
libtpu: 0.0.40
codegen_flags: <defaults>
</compile_context>

<pallas_src>
import functools

import jax
import jax.numpy as jnp
from jax import lax
from jax.experimental import pallas as pl
from jax.experimental.pallas import tpu as pltpu


def _round_up(x, m):
    return (x + m - 1) // m * m


# ----------------------------------------------------------------------------
# BN folding: conv(no bias) + BN(inference) == matmul with scaled weight + bias
# ----------------------------------------------------------------------------
def _fold_bn(w_oihw, gamma, beta, mean, var, eps=1e-4):
    cout, cin, kh, kw = w_oihw.shape
    scale = gamma / jnp.sqrt(var + eps)                       # (Cout,)
    bias = beta - mean * scale                                # (Cout,)
    # (Cout, Cin, KH, KW) -> (KH, KW, Cin, Cout) -> (KH*KW*Cin, Cout)
    w = jnp.transpose(w_oihw, (2, 3, 1, 0)).reshape(kh * kw * cin, cout)
    w = (w * scale[None, :]).astype(jnp.bfloat16)
    return w, bias.reshape(1, cout).astype(jnp.float32)


# ----------------------------------------------------------------------------
# Wrapper-side im2col for stage 1 only (reads just the tiny raw input), with
# rows grouped by stage-1 output parity so the kernel can fill its phase
# scratch with 4 plain matmuls:
#   result[n, 2*hp + wp, i2*ow2p + j2, :] = patch of stage-1 output pixel
#   (2*i2 + hp, 2*j2 + wp).
# ----------------------------------------------------------------------------
def _im2col_s2_grouped(x_nhwc, oh2p, ow2p):
    n, h, w, c = x_nhwc.shape
    oh1, ow1 = h // 2, w // 2
    xp = jnp.pad(x_nhwc, ((0, 0), (1, 1), (1, 1), (0, 0)))
    taps = []
    for ky in range(3):
        for kx in range(3):
            taps.append(xp[:, ky:ky + 2 * oh1 - 1:2, kx:kx + 2 * ow1 - 1:2, :])
    p = jnp.stack(taps, axis=3).reshape(n, oh1, ow1, 9 * c)
    p = p.reshape(n, oh2p, 2, ow2p, 2, 9 * c)
    p = jnp.transpose(p, (0, 2, 4, 1, 3, 5))
    return p.reshape(n, 4, oh2p * ow2p, 9 * c)


# ----------------------------------------------------------------------------
# Fused kernel: one batch element per grid step.
#   stage 1: 4 parity-phase matmuls -> VMEM scratch a1_ref[hp, variant, :, :]
#            variant 0: A1[2*i2+hp, 2*j2-1]  (left  neighbour, zero at j2==0)
#            variant 1: A1[2*i2+hp, 2*j2  ]  (even columns)
#            variant 2: A1[2*i2+hp, 2*j2+1]  (odd  columns)
#            rows [0, ow2p) of every plane hold the "-1" (zero-pad) phase row.
#   stage 2: 9 taps, each an 8-aligned (M2, C1) slice of the scratch @ (C1, C2)
#            accumulated in f32, + bias, ReLU, written unpadded (48 lanes).
# ----------------------------------------------------------------------------
def _fused_patch_embed_kernel(p1_ref, w1_ref, b1_ref, w2_ref, b2_ref,
                              o_ref, a1_ref, *,
                              oh2p, ow2p, oh1, ow1, oh2, ow2):
    m2 = oh2p * ow2p
    c1 = w1_ref.shape[1]
    c2 = o_ref.shape[-1]
    f32 = jnp.float32

    # zero the leading pad row-block (stage-2's top padding) of every plane
    for hp in range(2):
        for v in range(3):
            a1_ref[hp, v, 0:ow2p, :] = jnp.zeros((ow2p, c1), a1_ref.dtype)

    flat = lax.broadcasted_iota(jnp.int32, (m2, 1), 0)
    col = flat % ow2p
    keep_shift = (col != 0).astype(f32)   # left-neighbour variant: j2==0 -> 0

    # Zeroing of out-of-range stage-1 pixels is only needed when the spatial
    # padding can leak into true stage-2 outputs (H or W == 1, 2 mod 4).
    need_valid_mask = (2 * oh2 - 1 >= oh1) or (2 * ow2 - 1 >= ow1)

    w1 = w1_ref[...]
    b1 = b1_ref[...]

    # ---- stage 1: conv + BN + ReLU, one matmul per output-parity phase -----
    for hp in range(2):
        for wp in range(2):
            patches = p1_ref[0, hp * 2 + wp]                       # (m2, 9*Cin)
            a1 = jnp.dot(patches, w1, preferred_element_type=f32) + b1
            a1 = jnp.maximum(a1, 0.0)
            if need_valid_mask:
                row = flat // ow2p
                valid = jnp.logical_and(2 * row + hp < oh1,
                                        2 * col + wp < ow1).astype(f32)
                a1 = a1 * valid
            a1_ref[hp, 1 + wp, ow2p:ow2p + m2, :] = a1.astype(a1_ref.dtype)
            if wp == 1:
                # left-neighbour columns: shift the odd-column phase one flat
                # row down (cheap XLU roll) and zero the row-start entries.
                shifted = pltpu.roll(a1, shift=1, axis=0) * keep_shift
                a1_ref[hp, 0, ow2p:ow2p + m2, :] = shifted.astype(a1_ref.dtype)

    # ---- stage 2: 9 accumulated taps over the VMEM-resident phases ---------
    acc = jnp.zeros((m2, c2), f32)
    for ky in range(3):
        hp = 0 if ky == 1 else 1        # parity of stage-1 row 2*i2 + ky - 1
        rs = 0 if ky == 0 else ow2p     # flat row offset (ky==0 -> row i2 - 1)
        for kx in range(3):
            a_tap = a1_ref[hp, kx, rs:rs + m2, :]                  # (m2, c1)
            acc = acc + jnp.dot(a_tap, w2_ref[ky * 3 + kx],
                                preferred_element_type=f32)
    o_ref[0] = jnp.maximum(acc + b2_ref[...], 0.0)


def _fused_patch_embed_call(p1g, w1, b1, w2, b2, *,
                            oh2p, ow2p, oh1, ow1, oh2, ow2):
    n = p1g.shape[0]
    m2 = oh2p * ow2p
    f1 = p1g.shape[-1]
    c1 = w1.shape[-1]
    c2 = w2.shape[-1]
    kernel = functools.partial(_fused_patch_embed_kernel, oh2p=oh2p, ow2p=ow2p,
                               oh1=oh1, ow1=ow1, oh2=oh2, ow2=ow2)
    return pl.pallas_call(
        kernel,
        out_shape=jax.ShapeDtypeStruct((n, m2, c2), jnp.float32),
        grid=(n,),
        in_specs=[
            pl.BlockSpec((1, 4, m2, f1), lambda i: (i, 0, 0, 0)),  # streamed
            pl.BlockSpec((f1, c1), lambda i: (0, 0)),              # resident
            pl.BlockSpec((1, c1), lambda i: (0, 0)),               # resident
            pl.BlockSpec((9, c1, c2), lambda i: (0, 0, 0)),        # resident
            pl.BlockSpec((1, c2), lambda i: (0, 0)),               # resident
        ],
        out_specs=pl.BlockSpec((1, m2, c2), lambda i: (i, 0, 0)),
        scratch_shapes=[
            pltpu.VMEM((2, 3, (oh2p + 1) * ow2p, c1), jnp.bfloat16),
        ],
        compiler_params=pltpu.CompilerParams(
            dimension_semantics=("parallel",),   # batch shards across v7x TCs
            vmem_limit_bytes=48 * 1024 * 1024,   # headroom under v7x's 64 MiB
        ),
    )(p1g, w1, b1, w2, b2)


# ----------------------------------------------------------------------------
# Forward pass: Identity -> [conv3x3/s2/p1 -> BN(eps=1e-4) -> ReLU] x 2
# ----------------------------------------------------------------------------
@jax.jit
def patch_embed_forward(x_nchw, params):
    eps = 1e-4
    w1m, b1v = _fold_bn(params["w1"], params["g1"], params["b1"],
                        params["m1"], params["v1"], eps)
    w2m, b2v = _fold_bn(params["w2"], params["g2"], params["b2"],
                        params["m2"], params["v2"], eps)
    c1 = w1m.shape[-1]
    c2 = w2m.shape[-1]
    w2m = w2m.reshape(9, c1, c2)                   # per-tap (C1, C2) slices

    n, cin, h, w = x_nchw.shape
    oh1, ow1 = (h - 1) // 2 + 1, (w - 1) // 2 + 1
    oh2, ow2 = (oh1 - 1) // 2 + 1, (ow1 - 1) // 2 + 1
    h_pad = _round_up(h, 4)      # parity decomposition needs H % 4 == 0
    w_pad = _round_up(w, 32)     # and OW2p % 8 == 0 for 8-aligned VMEM slices
    oh2p, ow2p = h_pad // 4, w_pad // 4

    # Cast to bf16 BEFORE the (tiny, stage-1-only) wrapper-side im2col; the
    # NCHW->NHWC transpose fuses into the same XLA relayout pass.
    x = jnp.transpose(x_nchw, (0, 2, 3, 1)).astype(jnp.bfloat16)
    x = jnp.pad(x, ((0, 0), (0, h_pad - h), (0, w_pad - w), (0, 0)))
    p1g = _im2col_s2_grouped(x, oh2p, ow2p)        # (N, 4, OH2p*OW2p, 9*Cin)

    out = _fused_patch_embed_call(p1g, w1m, b1v, w2m, b2v,
                                  oh2p=oh2p, ow2p=ow2p,
                                  oh1=oh1, ow1=ow1, oh2=oh2, ow2=ow2)
    out = out.reshape(n, oh2p, ow2p, c2)[:, :oh2, :ow2, :]
    return jnp.transpose(out, (0, 3, 1, 2))        # NHWC -> NCHW


# ----------------------------------------------------------------------------
# Pure-JAX f32 reference (lax.conv) for the correctness check.
# ----------------------------------------------------------------------------
def _reference(x_nchw, params, eps=1e-4):
    def stage(x, w, g, b, m, v):
        y = lax.conv_general_dilated(
            x, w, window_strides=(2, 2), padding=((1, 1), (1, 1)),
            dimension_numbers=("NCHW", "OIHW", "NCHW"))
        scale = (g / jnp.sqrt(v + eps))[None, :, None, None]
        bias = (b - m * (g / jnp.sqrt(v + eps)))[None, :, None, None]
        return jnp.maximum(y * scale + bias, 0.0)

    x = stage(x_nchw, params["w1"], params["g1"], params["b1"],
              params["m1"], params["v1"])
    x = stage(x, params["w2"], params["g2"], params["b2"],
              params["m2"], params["v2"])
    return x


if __name__ == "__main__":
    # Small shapes consistent with the module: in_chans=4, in_dim=32, dim=48.
    N, C_IN, H, W = 2, 4, 16, 16
    IN_DIM, DIM = 32, 48

    key = jax.random.PRNGKey(0)
    ks = jax.random.split(key, 9)
    x = jax.random.normal(ks[0], (N, C_IN, H, W), dtype=jnp.float32)

    params = {
        # conv weights (OIHW, no bias)
        "w1": jax.random.normal(ks[1], (IN_DIM, C_IN, 3, 3), jnp.float32) * 0.1,
        "w2": jax.random.normal(ks[2], (DIM, IN_DIM, 3, 3), jnp.float32) * 0.1,
        # BN1 affine params / running stats
        "g1": 1.0 + 0.1 * jax.random.normal(ks[3], (IN_DIM,), jnp.float32),
        "b1": 0.1 * jax.random.normal(ks[4], (IN_DIM,), jnp.float32),
        "m1": jnp.zeros((IN_DIM,), jnp.float32),
        "v1": jnp.ones((IN_DIM,), jnp.float32),
        # BN2 affine params / running stats
        "g2": 1.0 + 0.1 * jax.random.normal(ks[5], (DIM,), jnp.float32),
        "b2": 0.1 * jax.random.normal(ks[6], (DIM,), jnp.float32),
        "m2": jnp.zeros((DIM,), jnp.float32),
        "v2": jnp.ones((DIM,), jnp.float32),
    }

    out = jax.block_until_ready(patch_embed_forward(x, params))
    ref = jax.block_until_ready(_reference(x, params))

    assert out.shape == (N, DIM, H // 4, W // 4), out.shape
    # bf16 MXU operands + bf16 VMEM-resident stage-1 activation -> loose tol.
    assert jnp.allclose(out, ref, atol=5e-2, rtol=5e-2), \
        float(jnp.max(jnp.abs(out - ref)))

    print("KERNEL_OK")
</pallas_src>

<mosaic_0001>
module attributes {stable_mosaic.version = 11 : i64} {
  func.func @_fused_patch_embed_kernel(%arg0: i32, %arg1: memref<1x4x32x36xbf16, #tpu.memory_space<vmem>>, %arg2: memref<36x32xbf16, #tpu.memory_space<vmem>>, %arg3: memref<1x32xf32, #tpu.memory_space<vmem>>, %arg4: memref<9x32x48xbf16, #tpu.memory_space<vmem>>, %arg5: memref<1x48xf32, #tpu.memory_space<vmem>>, %arg6: memref<1x32x48xf32, #tpu.memory_space<vmem>>, %arg7: memref<2x3x40x32xbf16, #tpu.memory_space<vmem>>) attributes {dimension_semantics = [#tpu.dimension_semantics<parallel>], iteration_bounds = array<i64: 2>, scalar_prefetch = 0 : i64, scratch_operands = 1 : i64, tpu.core_type = #tpu.core_type<tc>, window_params = [{transform_indices = @transform_0, window_bounds = array<i64: 1, 4, 32, 36>}, {pipeline_mode = #tpu.pipeline_mode<synchronous>, transform_indices = @transform_1, window_bounds = array<i64: 36, 32>}, {pipeline_mode = #tpu.pipeline_mode<synchronous>, transform_indices = @transform_2, window_bounds = array<i64: 1, 32>}, {pipeline_mode = #tpu.pipeline_mode<synchronous>, transform_indices = @transform_3, window_bounds = array<i64: 9, 32, 48>}, {pipeline_mode = #tpu.pipeline_mode<synchronous>, transform_indices = @transform_4, window_bounds = array<i64: 1, 48>}, {transform_indices = @transform_5, window_bounds = array<i64: 1, 32, 48>}]} {
    %cst = arith.constant 0.000000e+00 : bf16
    %0 = vector.broadcast %cst : bf16 to vector<8x32xbf16>
    %c0 = arith.constant 0 : index
    %c0_0 = arith.constant 0 : index
    %c0_1 = arith.constant 0 : index
    %c0_2 = arith.constant 0 : index
    %1 = vector.load %arg7[%c0, %c0_0, %c0_1, %c0_2] : memref<2x3x40x32xbf16, #tpu.memory_space<vmem>>, vector<1x1x8x32xbf16>
    %2 = vector.shape_cast %1 : vector<1x1x8x32xbf16> to vector<8x32xbf16>
    %3 = vector.shape_cast %0 : vector<8x32xbf16> to vector<1x1x8x32xbf16>
    tpu.vector_store %arg7[%c0, %c0_0, %c0_1, %c0_2], %3 {strides = array<i32>} : memref<2x3x40x32xbf16, #tpu.memory_space<vmem>>, vector<1x1x8x32xbf16>,
    %cst_3 = arith.constant 0.000000e+00 : bf16
    %4 = vector.broadcast %cst_3 : bf16 to vector<8x32xbf16>
    %c0_4 = arith.constant 0 : index
    %c1 = arith.constant 1 : index
    %c0_5 = arith.constant 0 : index
    %c0_6 = arith.constant 0 : index
    %5 = vector.load %arg7[%c0_4, %c1, %c0_5, %c0_6] : memref<2x3x40x32xbf16, #tpu.memory_space<vmem>>, vector<1x1x8x32xbf16>
    %6 = vector.shape_cast %5 : vector<1x1x8x32xbf16> to vector<8x32xbf16>
    %7 = vector.shape_cast %4 : vector<8x32xbf16> to vector<1x1x8x32xbf16>
    tpu.vector_store %arg7[%c0_4, %c1, %c0_5, %c0_6], %7 {strides = array<i32>} : memref<2x3x40x32xbf16, #tpu.memory_space<vmem>>, vector<1x1x8x32xbf16>,
    %cst_7 = arith.constant 0.000000e+00 : bf16
    %8 = vector.broadcast %cst_7 : bf16 to vector<8x32xbf16>
    %c0_8 = arith.constant 0 : index
    %c2 = arith.constant 2 : index
    %c0_9 = arith.constant 0 : index
    %c0_10 = arith.constant 0 : index
    %9 = vector.load %arg7[%c0_8, %c2, %c0_9, %c0_10] : memref<2x3x40x32xbf16, #tpu.memory_space<vmem>>, vector<1x1x8x32xbf16>
    %10 = vector.shape_cast %9 : vector<1x1x8x32xbf16> to vector<8x32xbf16>
    %11 = vector.shape_cast %8 : vector<8x32xbf16> to vector<1x1x8x32xbf16>
    tpu.vector_store %arg7[%c0_8, %c2, %c0_9, %c0_10], %11 {strides = array<i32>} : memref<2x3x40x32xbf16, #tpu.memory_space<vmem>>, vector<1x1x8x32xbf16>,
    %cst_11 = arith.constant 0.000000e+00 : bf16
    %12 = vector.broadcast %cst_11 : bf16 to vector<8x32xbf16>
    %c1_12 = arith.constant 1 : index
    %c0_13 = arith.constant 0 : index
    %c0_14 = arith.constant 0 : index
    %c0_15 = arith.constant 0 : index
    %13 = vector.load %arg7[%c1_12, %c0_13, %c0_14, %c0_15] : memref<2x3x40x32xbf16, #tpu.memory_space<vmem>>, vector<1x1x8x32xbf16>
    %14 = vector.shape_cast %13 : vector<1x1x8x32xbf16> to vector<8x32xbf16>
    %15 = vector.shape_cast %12 : vector<8x32xbf16> to vector<1x1x8x32xbf16>
    tpu.vector_store %arg7[%c1_12, %c0_13, %c0_14, %c0_15], %15 {strides = array<i32>} : memref<2x3x40x32xbf16, #tpu.memory_space<vmem>>, vector<1x1x8x32xbf16>,
    %cst_16 = arith.constant 0.000000e+00 : bf16
    %16 = vector.broadcast %cst_16 : bf16 to vector<8x32xbf16>
    %c1_17 = arith.constant 1 : index
    %c1_18 = arith.constant 1 : index
    %c0_19 = arith.constant 0 : index
    %c0_20 = arith.constant 0 : index
    %17 = vector.load %arg7[%c1_17, %c1_18, %c0_19, %c0_20] : memref<2x3x40x32xbf16, #tpu.memory_space<vmem>>, vector<1x1x8x32xbf16>
    %18 = vector.shape_cast %17 : vector<1x1x8x32xbf16> to vector<8x32xbf16>
    %19 = vector.shape_cast %16 : vector<8x32xbf16> to vector<1x1x8x32xbf16>
    tpu.vector_store %arg7[%c1_17, %c1_18, %c0_19, %c0_20], %19 {strides = array<i32>} : memref<2x3x40x32xbf16, #tpu.memory_space<vmem>>, vector<1x1x8x32xbf16>,
    %cst_21 = arith.constant 0.000000e+00 : bf16
    %20 = vector.broadcast %cst_21 : bf16 to vector<8x32xbf16>
    %c1_22 = arith.constant 1 : index
    %c2_23 = arith.constant 2 : index
    %c0_24 = arith.constant 0 : index
    %c0_25 = arith.constant 0 : index
    %21 = vector.load %arg7[%c1_22, %c2_23, %c0_24, %c0_25] : memref<2x3x40x32xbf16, #tpu.memory_space<vmem>>, vector<1x1x8x32xbf16>
    %22 = vector.shape_cast %21 : vector<1x1x8x32xbf16> to vector<8x32xbf16>
    %23 = vector.shape_cast %20 : vector<8x32xbf16> to vector<1x1x8x32xbf16>
    tpu.vector_store %arg7[%c1_22, %c2_23, %c0_24, %c0_25], %23 {strides = array<i32>} : memref<2x3x40x32xbf16, #tpu.memory_space<vmem>>, vector<1x1x8x32xbf16>,
    %24 = tpu.iota {dimensions = array<i32: 0>} : vector<32x1xi32>
    %c8_i32 = arith.constant 8 : i32
    %c0_i32 = arith.constant 0 : i32
    %25 = arith.cmpi eq, %c8_i32, %c0_i32 : i32
    %c1_i32 = arith.constant 1 : i32
    %26 = arith.select %25, %c1_i32, %c8_i32 : i32
    %27 = vector.broadcast %26 : i32 to vector<32x1xi32>
    %28 = arith.remsi %24, %27 : vector<32x1xi32>
    %c0_i32_26 = arith.constant 0 : i32
    %29 = vector.broadcast %c0_i32_26 : i32 to vector<32x1xi32>
    %30 = arith.cmpi ne, %28, %29 : vector<32x1xi32>
    %c0_i32_27 = arith.constant 0 : i32
    %31 = vector.broadcast %c0_i32_27 : i32 to vector<32x1xi32>
    %32 = arith.cmpi slt, %28, %31 : vector<32x1xi32>
    %c0_i32_28 = arith.constant 0 : i32
    %33 = arith.cmpi slt, %26, %c0_i32_28 : i32
    %34 = vector.broadcast %33 : i1 to vector<32x1xi1>
    %35 = vector.broadcast %34 : vector<32x1xi1> to vector<32x1xi1>
    %36 = arith.xori %32, %35 : vector<32x1xi1>
    %37 = arith.andi %36, %30 : vector<32x1xi1>
    %38 = vector.broadcast %26 : i32 to vector<32x1xi32>
    %39 = arith.addi %28, %38 : vector<32x1xi32>
    %40 = arith.select %37, %39, %28 : vector<32x1xi1>, vector<32x1xi32>
    %c0_i32_29 = arith.constant 0 : i32
    %41 = vector.broadcast %c0_i32_29 : i32 to vector<32x1xi32>
    %42 = arith.cmpi ne, %40, %41 : vector<32x1xi32>
    %43 = arith.extui %42 : vector<32x1xi1> to vector<32x1xi32>
    %44 = arith.sitofp %43 : vector<32x1xi32> to vector<32x1xf32>
    %c0_30 = arith.constant 0 : index
    %c0_31 = arith.constant 0 : index
    %45 = vector.load %arg2[%c0_30, %c0_31] : memref<36x32xbf16, #tpu.memory_space<vmem>>, vector<36x32xbf16>
    %c0_32 = arith.constant 0 : index
    %c0_33 = arith.constant 0 : index
    %46 = vector.load %arg3[%c0_32, %c0_33] : memref<1x32xf32, #tpu.memory_space<vmem>>, vector<1x32xf32>
    %c0_34 = arith.constant 0 : index
    %c0_35 = arith.constant 0 : index
    %c0_36 = arith.constant 0 : index
    %c0_37 = arith.constant 0 : index
    %47 = vector.load %arg1[%c0_34, %c0_35, %c0_36, %c0_37] : memref<1x4x32x36xbf16, #tpu.memory_space<vmem>>, vector<1x1x32x36xbf16>
    %48 = vector.shape_cast %47 : vector<1x1x32x36xbf16> to vector<32x36xbf16>
    %cst_38 = arith.constant dense<0.000000e+00> : vector<32x32xf32>
    %49 = tpu.matmul %48, %45, %cst_38 {dimension_numbers = #tpu.dot_dimension_numbers<[1], [0], [0], [1], [0, 0, 1, 1], [], []>} : vector<32x36xbf16>, vector<36x32xbf16>, vector<32x32xf32> -> vector<32x32xf32>
    %50 = vector.broadcast %46 : vector<1x32xf32> to vector<32x32xf32>
    %51 = arith.addf %49, %50 : vector<32x32xf32>
    %cst_39 = arith.constant 0.000000e+00 : f32
    %52 = vector.broadcast %cst_39 : f32 to vector<32x32xf32>
    %53 = arith.maximumf %51, %52 : vector<32x32xf32>
    %54 = arith.truncf %53 : vector<32x32xf32> to vector<32x32xbf16>
    %c0_40 = arith.constant 0 : index
    %c1_41 = arith.constant 1 : index
    %c8 = arith.constant 8 : index
    %c0_42 = arith.constant 0 : index
    %55 = vector.load %arg7[%c0_40, %c1_41, %c8, %c0_42] : memref<2x3x40x32xbf16, #tpu.memory_space<vmem>>, vector<1x1x32x32xbf16>
    %56 = vector.shape_cast %55 : vector<1x1x32x32xbf16> to vector<32x32xbf16>
    %57 = vector.shape_cast %54 : vector<32x32xbf16> to vector<1x1x32x32xbf16>
    tpu.vector_store %arg7[%c0_40, %c1_41, %c8, %c0_42], %57 {strides = array<i32>} : memref<2x3x40x32xbf16, #tpu.memory_space<vmem>>, vector<1x1x32x32xbf16>,
    %c0_43 = arith.constant 0 : index
    %c1_44 = arith.constant 1 : index
    %c0_45 = arith.constant 0 : index
    %c0_46 = arith.constant 0 : index
    %58 = vector.load %arg1[%c0_43, %c1_44, %c0_45, %c0_46] : memref<1x4x32x36xbf16, #tpu.memory_space<vmem>>, vector<1x1x32x36xbf16>
    %59 = vector.shape_cast %58 : vector<1x1x32x36xbf16> to vector<32x36xbf16>
    %cst_47 = arith.constant dense<0.000000e+00> : vector<32x32xf32>
    %60 = tpu.matmul %59, %45, %cst_47 {dimension_numbers = #tpu.dot_dimension_numbers<[1], [0], [0], [1], [0, 0, 1, 1], [], []>} : vector<32x36xbf16>, vector<36x32xbf16>, vector<32x32xf32> -> vector<32x32xf32>
    %61 = vector.broadcast %46 : vector<1x32xf32> to vector<32x32xf32>
    %62 = arith.addf %60, %61 : vector<32x32xf32>
    %cst_48 = arith.constant 0.000000e+00 : f32
    %63 = vector.broadcast %cst_48 : f32 to vector<32x32xf32>
    %64 = arith.maximumf %62, %63 : vector<32x32xf32>
    %65 = arith.truncf %64 : vector<32x32xf32> to vector<32x32xbf16>
    %c0_49 = arith.constant 0 : index
    %c2_50 = arith.constant 2 : index
    %c8_51 = arith.constant 8 : index
    %c0_52 = arith.constant 0 : index
    %66 = vector.load %arg7[%c0_49, %c2_50, %c8_51, %c0_52] : memref<2x3x40x32xbf16, #tpu.memory_space<vmem>>, vector<1x1x32x32xbf16>
    %67 = vector.shape_cast %66 : vector<1x1x32x32xbf16> to vector<32x32xbf16>
    %68 = vector.shape_cast %65 : vector<32x32xbf16> to vector<1x1x32x32xbf16>
    tpu.vector_store %arg7[%c0_49, %c2_50, %c8_51, %c0_52], %68 {strides = array<i32>} : memref<2x3x40x32xbf16, #tpu.memory_space<vmem>>, vector<1x1x32x32xbf16>,
    %c1_i32_53 = arith.constant 1 : i32
    %69 = tpu.dynamic_rotate %64 by %c1_i32_53 dim 0 : vector<32x32xf32>, i32 -> vector<32x32xf32>
    %70 = vector.broadcast %44 : vector<32x1xf32> to vector<32x32xf32>
    %71 = arith.mulf %69, %70 : vector<32x32xf32>
    %72 = arith.truncf %71 : vector<32x32xf32> to vector<32x32xbf16>
    %c0_54 = arith.constant 0 : index
    %c0_55 = arith.constant 0 : index
    %c8_56 = arith.constant 8 : index
    %c0_57 = arith.constant 0 : index
    %73 = vector.load %arg7[%c0_54, %c0_55, %c8_56, %c0_57] : memref<2x3x40x32xbf16, #tpu.memory_space<vmem>>, vector<1x1x32x32xbf16>
    %74 = vector.shape_cast %73 : vector<1x1x32x32xbf16> to vector<32x32xbf16>
    %75 = vector.shape_cast %72 : vector<32x32xbf16> to vector<1x1x32x32xbf16>
    tpu.vector_store %arg7[%c0_54, %c0_55, %c8_56, %c0_57], %75 {strides = array<i32>} : memref<2x3x40x32xbf16, #tpu.memory_space<vmem>>, vector<1x1x32x32xbf16>,
    %c0_58 = arith.constant 0 : index
    %c2_59 = arith.constant 2 : index
    %c0_60 = arith.constant 0 : index
    %c0_61 = arith.constant 0 : index
    %76 = vector.load %arg1[%c0_58, %c2_59, %c0_60, %c0_61] : memref<1x4x32x36xbf16, #tpu.memory_space<vmem>>, vector<1x1x32x36xbf16>
    %77 = vector.shape_cast %76 : vector<1x1x32x36xbf16> to vector<32x36xbf16>
    %cst_62 = arith.constant dense<0.000000e+00> : vector<32x32xf32>
    %78 = tpu.matmul %77, %45, %cst_62 {dimension_numbers = #tpu.dot_dimension_numbers<[1], [0], [0], [1], [0, 0, 1, 1], [], []>} : vector<32x36xbf16>, vector<36x32xbf16>, vector<32x32xf32> -> vector<32x32xf32>
    %79 = vector.broadcast %46 : vector<1x32xf32> to vector<32x32xf32>
    %80 = arith.addf %78, %79 : vector<32x32xf32>
    %cst_63 = arith.constant 0.000000e+00 : f32
    %81 = vector.broadcast %cst_63 : f32 to vector<32x32xf32>
    %82 = arith.maximumf %80, %81 : vector<32x32xf32>
    %83 = arith.truncf %82 : vector<32x32xf32> to vector<32x32xbf16>
    %c1_64 = arith.constant 1 : index
    %c1_65 = arith.constant 1 : index
    %c8_66 = arith.constant 8 : index
    %c0_67 = arith.constant 0 : index
    %84 = vector.load %arg7[%c1_64, %c1_65, %c8_66, %c0_67] : memref<2x3x40x32xbf16, #tpu.memory_space<vmem>>, vector<1x1x32x32xbf16>
    %85 = vector.shape_cast %84 : vector<1x1x32x32xbf16> to vector<32x32xbf16>
    %86 = vector.shape_cast %83 : vector<32x32xbf16> to vector<1x1x32x32xbf16>
    tpu.vector_store %arg7[%c1_64, %c1_65, %c8_66, %c0_67], %86 {strides = array<i32>} : memref<2x3x40x32xbf16, #tpu.memory_space<vmem>>, vector<1x1x32x32xbf16>,
    %c0_68 = arith.constant 0 : index
    %c3 = arith.constant 3 : index
    %c0_69 = arith.constant 0 : index
    %c0_70 = arith.constant 0 : index
    %87 = vector.load %arg1[%c0_68, %c3, %c0_69, %c0_70] : memref<1x4x32x36xbf16, #tpu.memory_space<vmem>>, vector<1x1x32x36xbf16>
    %88 = vector.shape_cast %87 : vector<1x1x32x36xbf16> to vector<32x36xbf16>
    %cst_71 = arith.constant dense<0.000000e+00> : vector<32x32xf32>
    %89 = tpu.matmul %88, %45, %cst_71 {dimension_numbers = #tpu.dot_dimension_numbers<[1], [0], [0], [1], [0, 0, 1, 1], [], []>} : vector<32x36xbf16>, vector<36x32xbf16>, vector<32x32xf32> -> vector<32x32xf32>
    %90 = vector.broadcast %46 : vector<1x32xf32> to vector<32x32xf32>
    %91 = arith.addf %89, %90 : vector<32x32xf32>
    %cst_72 = arith.constant 0.000000e+00 : f32
    %92 = vector.broadcast %cst_72 : f32 to vector<32x32xf32>
    %93 = arith.maximumf %91, %92 : vector<32x32xf32>
    %94 = arith.truncf %93 : vector<32x32xf32> to vector<32x32xbf16>
    %c1_73 = arith.constant 1 : index
    %c2_74 = arith.constant 2 : index
    %c8_75 = arith.constant 8 : index
    %c0_76 = arith.constant 0 : index
    %95 = vector.load %arg7[%c1_73, %c2_74, %c8_75, %c0_76] : memref<2x3x40x32xbf16, #tpu.memory_space<vmem>>, vector<1x1x32x32xbf16>
    %96 = vector.shape_cast %95 : vector<1x1x32x32xbf16> to vector<32x32xbf16>
    %97 = vector.shape_cast %94 : vector<32x32xbf16> to vector<1x1x32x32xbf16>
    tpu.vector_store %arg7[%c1_73, %c2_74, %c8_75, %c0_76], %97 {strides = array<i32>} : memref<2x3x40x32xbf16, #tpu.memory_space<vmem>>, vector<1x1x32x32xbf16>,
    %c1_i32_77 = arith.constant 1 : i32
    %98 = tpu.dynamic_rotate %93 by %c1_i32_77 dim 0 : vector<32x32xf32>, i32 -> vector<32x32xf32>
    %99 = vector.broadcast %44 : vector<32x1xf32> to vector<32x32xf32>
    %100 = arith.mulf %98, %99 : vector<32x32xf32>
    %101 = arith.truncf %100 : vector<32x32xf32> to vector<32x32xbf16>
    %c1_78 = arith.constant 1 : index
    %c0_79 = arith.constant 0 : index
    %c8_80 = arith.constant 8 : index
    %c0_81 = arith.constant 0 : index
    %102 = vector.load %arg7[%c1_78, %c0_79, %c8_80, %c0_81] : memref<2x3x40x32xbf16, #tpu.memory_space<vmem>>, vector<1x1x32x32xbf16>
    %103 = vector.shape_cast %102 : vector<1x1x32x32xbf16> to vector<32x32xbf16>
    %104 = vector.shape_cast %101 : vector<32x32xbf16> to vector<1x1x32x32xbf16>
    tpu.vector_store %arg7[%c1_78, %c0_79, %c8_80, %c0_81], %104 {strides = array<i32>} : memref<2x3x40x32xbf16, #tpu.memory_space<vmem>>, vector<1x1x32x32xbf16>,
    %cst_82 = arith.constant 0.000000e+00 : f32
    %105 = vector.broadcast %cst_82 : f32 to vector<32x48xf32>
    %c1_83 = arith.constant 1 : index
    %c0_84 = arith.constant 0 : index
    %c0_85 = arith.constant 0 : index
    %c0_86 = arith.constant 0 : index
    %106 = vector.load %arg7[%c1_83, %c0_84, %c0_85, %c0_86] : memref<2x3x40x32xbf16, #tpu.memory_space<vmem>>, vector<1x1x32x32xbf16>
    %107 = vector.shape_cast %106 : vector<1x1x32x32xbf16> to vector<32x32xbf16>
    %c0_87 = arith.constant 0 : index
    %c0_88 = arith.constant 0 : index
    %c0_89 = arith.constant 0 : index
    %108 = vector.load %arg4[%c0_87, %c0_88, %c0_89] : memref<9x32x48xbf16, #tpu.memory_space<vmem>>, vector<1x32x48xbf16>
    %109 = vector.shape_cast %108 : vector<1x32x48xbf16> to vector<32x48xbf16>
    %cst_90 = arith.constant dense<0.000000e+00> : vector<32x48xf32>
    %110 = tpu.matmul %107, %109, %cst_90 {dimension_numbers = #tpu.dot_dimension_numbers<[1], [0], [0], [1], [0, 0, 1, 1], [], []>} : vector<32x32xbf16>, vector<32x48xbf16>, vector<32x48xf32> -> vector<32x48xf32>
    %111 = arith.addf %105, %110 : vector<32x48xf32>
    %c1_91 = arith.constant 1 : index
    %c1_92 = arith.constant 1 : index
    %c0_93 = arith.constant 0 : index
    %c0_94 = arith.constant 0 : index
    %112 = vector.load %arg7[%c1_91, %c1_92, %c0_93, %c0_94] : memref<2x3x40x32xbf16, #tpu.memory_space<vmem>>, vector<1x1x32x32xbf16>
    %113 = vector.shape_cast %112 : vector<1x1x32x32xbf16> to vector<32x32xbf16>
    %c1_95 = arith.constant 1 : index
    %c0_96 = arith.constant 0 : index
    %c0_97 = arith.constant 0 : index
    %114 = vector.load %arg4[%c1_95, %c0_96, %c0_97] : memref<9x32x48xbf16, #tpu.memory_space<vmem>>, vector<1x32x48xbf16>
    %115 = vector.shape_cast %114 : vector<1x32x48xbf16> to vector<32x48xbf16>
    %cst_98 = arith.constant dense<0.000000e+00> : vector<32x48xf32>
    %116 = tpu.matmul %113, %115, %cst_98 {dimension_numbers = #tpu.dot_dimension_numbers<[1], [0], [0], [1], [0, 0, 1, 1], [], []>} : vector<32x32xbf16>, vector<32x48xbf16>, vector<32x48xf32> -> vector<32x48xf32>
    %117 = arith.addf %111, %116 : vector<32x48xf32>
    %c1_99 = arith.constant 1 : index
    %c2_100 = arith.constant 2 : index
    %c0_101 = arith.constant 0 : index
    %c0_102 = arith.constant 0 : index
    %118 = vector.load %arg7[%c1_99, %c2_100, %c0_101, %c0_102] : memref<2x3x40x32xbf16, #tpu.memory_space<vmem>>, vector<1x1x32x32xbf16>
    %119 = vector.shape_cast %118 : vector<1x1x32x32xbf16> to vector<32x32xbf16>
    %c2_103 = arith.constant 2 : index
    %c0_104 = arith.constant 0 : index
    %c0_105 = arith.constant 0 : index
    %120 = vector.load %arg4[%c2_103, %c0_104, %c0_105] : memref<9x32x48xbf16, #tpu.memory_space<vmem>>, vector<1x32x48xbf16>
    %121 = vector.shape_cast %120 : vector<1x32x48xbf16> to vector<32x48xbf16>
    %cst_106 = arith.constant dense<0.000000e+00> : vector<32x48xf32>
    %122 = tpu.matmul %119, %121, %cst_106 {dimension_numbers = #tpu.dot_dimension_numbers<[1], [0], [0], [1], [0, 0, 1, 1], [], []>} : vector<32x32xbf16>, vector<32x48xbf16>, vector<32x48xf32> -> vector<32x48xf32>
    %123 = arith.addf %117, %122 : vector<32x48xf32>
    %c0_107 = arith.constant 0 : index
    %c0_108 = arith.constant 0 : index
    %c8_109 = arith.constant 8 : index
    %c0_110 = arith.constant 0 : index
    %124 = vector.load %arg7[%c0_107, %c0_108, %c8_109, %c0_110] : memref<2x3x40x32xbf16, #tpu.memory_space<vmem>>, vector<1x1x32x32xbf16>
    %125 = vector.shape_cast %124 : vector<1x1x32x32xbf16> to vector<32x32xbf16>
    %c3_111 = arith.constant 3 : index
    %c0_112 = arith.constant 0 : index
    %c0_113 = arith.constant 0 : index
    %126 = vector.load %arg4[%c3_111, %c0_112, %c0_113] : memref<9x32x48xbf16, #tpu.memory_space<vmem>>, vector<1x32x48xbf16>
    %127 = vector.shape_cast %126 : vector<1x32x48xbf16> to vector<32x48xbf16>
    %cst_114 = arith.constant dense<0.000000e+00> : vector<32x48xf32>
    %128 = tpu.matmul %125, %127, %cst_114 {dimension_numbers = #tpu.dot_dimension_numbers<[1], [0], [0], [1], [0, 0, 1, 1], [], []>} : vector<32x32xbf16>, vector<32x48xbf16>, vector<32x48xf32> -> vector<32x48xf32>
    %129 = arith.addf %123, %128 : vector<32x48xf32>
    %c0_115 = arith.constant 0 : index
    %c1_116 = arith.constant 1 : index
    %c8_117 = arith.constant 8 : index
    %c0_118 = arith.constant 0 : index
    %130 = vector.load %arg7[%c0_115, %c1_116, %c8_117, %c0_118] : memref<2x3x40x32xbf16, #tpu.memory_space<vmem>>, vector<1x1x32x32xbf16>
    %131 = vector.shape_cast %130 : vector<1x1x32x32xbf16> to vector<32x32xbf16>
    %c4 = arith.constant 4 : index
    %c0_119 = arith.constant 0 : index
    %c0_120 = arith.constant 0 : index
    %132 = vector.load %arg4[%c4, %c0_119, %c0_120] : memref<9x32x48xbf16, #tpu.memory_space<vmem>>, vector<1x32x48xbf16>
    %133 = vector.shape_cast %132 : vector<1x32x48xbf16> to vector<32x48xbf16>
    %cst_121 = arith.constant dense<0.000000e+00> : vector<32x48xf32>
    %134 = tpu.matmul %131, %133, %cst_121 {dimension_numbers = #tpu.dot_dimension_numbers<[1], [0], [0], [1], [0, 0, 1, 1], [], []>} : vector<32x32xbf16>, vector<32x48xbf16>, vector<32x48xf32> -> vector<32x48xf32>
    %135 = arith.addf %129, %134 : vector<32x48xf32>
    %c0_122 = arith.constant 0 : index
    %c2_123 = arith.constant 2 : index
    %c8_124 = arith.constant 8 : index
    %c0_125 = arith.constant 0 : index
    %136 = vector.load %arg7[%c0_122, %c2_123, %c8_124, %c0_125] : memref<2x3x40x32xbf16, #tpu.memory_space<vmem>>, vector<1x1x32x32xbf16>
    %137 = vector.shape_cast %136 : vector<1x1x32x32xbf16> to vector<32x32xbf16>
    %c5 = arith.constant 5 : index
    %c0_126 = arith.constant 0 : index
    %c0_127 = arith.constant 0 : index
    %138 = vector.load %arg4[%c5, %c0_126, %c0_127] : memref<9x32x48xbf16, #tpu.memory_space<vmem>>, vector<1x32x48xbf16>
    %139 = vector.shape_cast %138 : vector<1x32x48xbf16> to vector<32x48xbf16>
    %cst_128 = arith.constant dense<0.000000e+00> : vector<32x48xf32>
    %140 = tpu.matmul %137, %139, %cst_128 {dimension_numbers = #tpu.dot_dimension_numbers<[1], [0], [0], [1], [0, 0, 1, 1], [], []>} : vector<32x32xbf16>, vector<32x48xbf16>, vector<32x48xf32> -> vector<32x48xf32>
    %141 = arith.addf %135, %140 : vector<32x48xf32>
    %c1_129 = arith.constant 1 : index
    %c0_130 = arith.constant 0 : index
    %c8_131 = arith.constant 8 : index
    %c0_132 = arith.constant 0 : index
    %142 = vector.load %arg7[%c1_129, %c0_130, %c8_131, %c0_132] : memref<2x3x40x32xbf16, #tpu.memory_space<vmem>>, vector<1x1x32x32xbf16>
    %143 = vector.shape_cast %142 : vector<1x1x32x32xbf16> to vector<32x32xbf16>
    %c6 = arith.constant 6 : index
    %c0_133 = arith.constant 0 : index
    %c0_134 = arith.constant 0 : index
    %144 = vector.load %arg4[%c6, %c0_133, %c0_134] : memref<9x32x48xbf16, #tpu.memory_space<vmem>>, vector<1x32x48xbf16>
    %145 = vector.shape_cast %144 : vector<1x32x48xbf16> to vector<32x48xbf16>
    %cst_135 = arith.constant dense<0.000000e+00> : vector<32x48xf32>
    %146 = tpu.matmul %143, %145, %cst_135 {dimension_numbers = #tpu.dot_dimension_numbers<[1], [0], [0], [1], [0, 0, 1, 1], [], []>} : vector<32x32xbf16>, vector<32x48xbf16>, vector<32x48xf32> -> vector<32x48xf32>
    %147 = arith.addf %141, %146 : vector<32x48xf32>
    %c1_136 = arith.constant 1 : index
    %c1_137 = arith.constant 1 : index
    %c8_138 = arith.constant 8 : index
    %c0_139 = arith.constant 0 : index
    %148 = vector.load %arg7[%c1_136, %c1_137, %c8_138, %c0_139] : memref<2x3x40x32xbf16, #tpu.memory_space<vmem>>, vector<1x1x32x32xbf16>
    %149 = vector.shape_cast %148 : vector<1x1x32x32xbf16> to vector<32x32xbf16>
    %c7 = arith.constant 7 : index
    %c0_140 = arith.constant 0 : index
    %c0_141 = arith.constant 0 : index
    %150 = vector.load %arg4[%c7, %c0_140, %c0_141] : memref<9x32x48xbf16, #tpu.memory_space<vmem>>, vector<1x32x48xbf16>
    %151 = vector.shape_cast %150 : vector<1x32x48xbf16> to vector<32x48xbf16>
    %cst_142 = arith.constant dense<0.000000e+00> : vector<32x48xf32>
    %152 = tpu.matmul %149, %151, %cst_142 {dimension_numbers = #tpu.dot_dimension_numbers<[1], [0], [0], [1], [0, 0, 1, 1], [], []>} : vector<32x32xbf16>, vector<32x48xbf16>, vector<32x48xf32> -> vector<32x48xf32>
    %153 = arith.addf %147, %152 : vector<32x48xf32>
    %c1_143 = arith.constant 1 : index
    %c2_144 = arith.constant 2 : index
    %c8_145 = arith.constant 8 : index
    %c0_146 = arith.constant 0 : index
    %154 = vector.load %arg7[%c1_143, %c2_144, %c8_145, %c0_146] : memref<2x3x40x32xbf16, #tpu.memory_space<vmem>>, vector<1x1x32x32xbf16>
    %155 = vector.shape_cast %154 : vector<1x1x32x32xbf16> to vector<32x32xbf16>
    %c8_147 = arith.constant 8 : index
    %c0_148 = arith.constant 0 : index
    %c0_149 = arith.constant 0 : index
    %156 = vector.load %arg4[%c8_147, %c0_148, %c0_149] : memref<9x32x48xbf16, #tpu.memory_space<vmem>>, vector<1x32x48xbf16>
    %157 = vector.shape_cast %156 : vector<1x32x48xbf16> to vector<32x48xbf16>
    %cst_150 = arith.constant dense<0.000000e+00> : vector<32x48xf32>
    %158 = tpu.matmul %155, %157, %cst_150 {dimension_numbers = #tpu.dot_dimension_numbers<[1], [0], [0], [1], [0, 0, 1, 1], [], []>} : vector<32x32xbf16>, vector<32x48xbf16>, vector<32x48xf32> -> vector<32x48xf32>
    %159 = arith.addf %153, %158 : vector<32x48xf32>
    %c0_151 = arith.constant 0 : index
    %c0_152 = arith.constant 0 : index
    %160 = vector.load %arg5[%c0_151, %c0_152] : memref<1x48xf32, #tpu.memory_space<vmem>>, vector<1x48xf32>
    %161 = vector.broadcast %160 : vector<1x48xf32> to vector<32x48xf32>
    %162 = arith.addf %159, %161 : vector<32x48xf32>
    %cst_153 = arith.constant 0.000000e+00 : f32
    %163 = vector.broadcast %cst_153 : f32 to vector<32x48xf32>
    %164 = arith.maximumf %162, %163 : vector<32x48xf32>
    %c0_154 = arith.constant 0 : index
    %c0_155 = arith.constant 0 : index
    %c0_156 = arith.constant 0 : index
    %165 = vector.load %arg6[%c0_154, %c0_155, %c0_156] : memref<1x32x48xf32, #tpu.memory_space<vmem>>, vector<1x32x48xf32>
    %166 = vector.shape_cast %165 : vector<1x32x48xf32> to vector<32x48xf32>
    %167 = vector.shape_cast %164 : vector<32x48xf32> to vector<1x32x48xf32>
    tpu.vector_store %arg6[%c0_154, %c0_155, %c0_156], %167 {strides = array<i32>} : memref<1x32x48xf32, #tpu.memory_space<vmem>>, vector<1x32x48xf32>,
    return
  }
  func.func @transform_0(%arg0: i32) -> (i32, i32, i32, i32) {
    %c0_i32 = arith.constant 0 : i32
    %c0_i32_0 = arith.constant 0 : i32
    %c0_i32_1 = arith.constant 0 : i32
    %c0_i32_2 = arith.constant 0 : i32
    return %arg0, %c0_i32, %c0_i32_0, %c0_i32_1 : i32, i32, i32, i32
  }
  func.func @transform_1(%arg0: i32) -> (i32, i32) {
    %c0_i32 = arith.constant 0 : i32
    %c0_i32_0 = arith.constant 0 : i32
    %c0_i32_1 = arith.constant 0 : i32
    return %c0_i32, %c0_i32_0 : i32, i32
  }
  func.func @transform_2(%arg0: i32) -> (i32, i32) {
    %c0_i32 = arith.constant 0 : i32
    %c0_i32_0 = arith.constant 0 : i32
    %c0_i32_1 = arith.constant 0 : i32
    return %c0_i32, %c0_i32_0 : i32, i32
  }
  func.func @transform_3(%arg0: i32) -> (i32, i32, i32) {
    %c0_i32 = arith.constant 0 : i32
    %c0_i32_0 = arith.constant 0 : i32
    %c0_i32_1 = arith.constant 0 : i32
    %c0_i32_2 = arith.constant 0 : i32
    return %c0_i32, %c0_i32_0, %c0_i32_1 : i32, i32, i32
  }
  func.func @transform_4(%arg0: i32) -> (i32, i32) {
    %c0_i32 = arith.constant 0 : i32
    %c0_i32_0 = arith.constant 0 : i32
    %c0_i32_1 = arith.constant 0 : i32
    return %c0_i32, %c0_i32_0 : i32, i32
  }
  func.func @transform_5(%arg0: i32) -> (i32, i32, i32) {
    %c0_i32 = arith.constant 0 : i32
    %c0_i32_0 = arith.constant 0 : i32
    %c0_i32_1 = arith.constant 0 : i32
    return %arg0, %c0_i32, %c0_i32_0 : i32, i32, i32
  }
}

</mosaic_0001>

<llo_original>
// kernel: patch_embed_forward.1
$region0: #{patch_embed_forward.1}
  #allocation0 [shape = 'u32[]', space=smem, size = 0x4, offset = 0x4, fixed_abs, tag = 'smem constant byte address 0x4 - core index']
  #allocation1 [shape = 'u32[144,128]{1,0:T(1,128)}', space=vmem, size = 0x12000, scoped, tag = 'internal scratch']
  #allocation2 [shape = 'bf16[2,3,40,32]{3,2,1,0:T(8,128)(2,1)}', space=vmem, size = 0xf000, scoped, tag = 'scratch operand']
  %s0 = inlined_call_operand.vmem [shape: bf16[2,4,32,36], index: 0, kind: input, shape index: {}]
  %s1 = inlined_call_operand.vmem [shape: bf16[36,32], index: 1, kind: input, shape index: {}]
  %s2 = inlined_call_operand.vmem [shape: f32[1,32], index: 2, kind: input, shape index: {}]
  %s3 = inlined_call_operand.vmem [shape: bf16[9,32,48], index: 3, kind: input, shape index: {}]
  %s4 = inlined_call_operand.vmem [shape: f32[1,48], index: 4, kind: input, shape index: {}]
  %s5 = inlined_call_operand.vmem [shape: f32[2,32,48], index: 5, kind: output, shape index: {}]
  %s6 = sld [smem:[#allocation0]]
  $region53: #{patch_embed_forward.1} parent=0
    _
  %s8 = ssub.s32 1, %s6
  %s9 = scalar_select 0, %s8, %s6
  loop: start=0, step=1, limit=4
  $region2: #{patch_embed_forward.1} parent=0 // loop_pre_header
    _
  $region3: #{patch_embed_forward.1} parent=0 // loop_header
    %s11 = sphi 0, %s15
    %p12 = scmp.ge.s32.totalorder %s11, 4
    %s21 = sphi 0, %s23
    %s24 = sphi 0, %s21
    %s25 = sphi 0, %s24
    %s41 = sphi 0, %s25
    %s45 = sphi 0, %s45
    %s47 = sphi 0, %s45
    %s48 = sphi 0, %s47
    %s62 = sphi 0, %s48
    %s66 = sphi 0, %s66
    %s68 = sphi 0, %s66
    %s69 = sphi 0, %s68
    %s83 = sphi 0, %s69
    %s87 = sphi 0, %s87
    %s89 = sphi 0, %s87
    %s90 = sphi 0, %s89
    %s104 = sphi 0, %s90
    %s108 = sphi 0, %s108
    %s110 = sphi 0, %s108
    %s111 = sphi 0, %s110
    %s125 = sphi 0, %s111
    %s131 = sphi 0, %s133
    %s134 = sphi 0, %s131
    %s135 = sphi 0, %s134
    %s151 = sphi 0, %s135
  $region4: #{patch_embed_forward.1} parent=0 // loop_header_branch
    %14 = sbr.rel (%p12) target = $region8
  $region5: #{patch_embed_forward.1} parent=0 // loop_body
    %s16 = ssub.s32 %s11, 1
    %s17 = ssub.s32 %s11, 2
    %s18 = sadd.s32 %s11, 1
    %s19 = ssub.s32 %s11, %s18
    %p20 = scmp.eq.s32.totalorder %s19, 0
    %s22 = sadd.s32 %s21, 1
    %s23 = scalar_select %p20, %s21, %s22
    %p26 = pneg %p20
    %p27 = scmp.eq.s32.totalorder %s11, 1
    %p28 = por %p26, %p27
    %p29 = scmp.ne.s32.totalorder %s21, %s24
    %p30 = scmp.eq.s32.totalorder %s11, 0
    %p31 = por %p29, %p30
    %p32 = scmp.ne.s32.totalorder %s21, %s24
    %p33 = scmp.eq.s32.totalorder %s16, 1
    %p34 = por %p32, %p33
    %p35 = scmp.ne.s32.totalorder %s24, %s25
    %p36 = scmp.eq.s32.totalorder %s16, 0
    %p37 = por %p35, %p36
    %p38 = scmp.ne.s32.totalorder %s24, %s25
    %p39 = scmp.eq.s32.totalorder %s17, 1
    %p40 = por %p38, %p39
    %p42 = scmp.ne.s32.totalorder %s25, %s41
    %p43 = scmp.eq.s32.totalorder %s17, 0
    %p44 = por %p42, %p43
    %s46 = sadd.s32 %s45, 1
    %p49 = scmp.eq.s32.totalorder %s11, 1
    %p50 = scmp.ne.s32.totalorder %s45, %s47
    %p51 = scmp.eq.s32.totalorder %s11, 0
    %p52 = por %p50, %p51
    %p53 = scmp.ne.s32.totalorder %s45, %s47
    %p54 = scmp.eq.s32.totalorder %s16, 1
    %p55 = por %p53, %p54
    %p56 = scmp.ne.s32.totalorder %s47, %s48
    %p57 = scmp.eq.s32.totalorder %s16, 0
    %p58 = por %p56, %p57
    %p59 = scmp.ne.s32.totalorder %s47, %s48
    %p60 = scmp.eq.s32.totalorder %s17, 1
    %p61 = por %p59, %p60
    %p63 = scmp.ne.s32.totalorder %s48, %s62
    %p64 = scmp.eq.s32.totalorder %s17, 0
    %p65 = por %p63, %p64
    %s67 = sadd.s32 %s66, 1
    %p70 = scmp.eq.s32.totalorder %s11, 1
    %p71 = scmp.ne.s32.totalorder %s66, %s68
    %p72 = scmp.eq.s32.totalorder %s11, 0
    %p73 = por %p71, %p72
    %p74 = scmp.ne.s32.totalorder %s66, %s68
    %p75 = scmp.eq.s32.totalorder %s16, 1
    %p76 = por %p74, %p75
    %p77 = scmp.ne.s32.totalorder %s68, %s69
    %p78 = scmp.eq.s32.totalorder %s16, 0
    %p79 = por %p77, %p78
    %p80 = scmp.ne.s32.totalorder %s68, %s69
    %p81 = scmp.eq.s32.totalorder %s17, 1
    %p82 = por %p80, %p81
    %p84 = scmp.ne.s32.totalorder %s69, %s83
    %p85 = scmp.eq.s32.totalorder %s17, 0
    %p86 = por %p84, %p85
    %s88 = sadd.s32 %s87, 1
    %p91 = scmp.eq.s32.totalorder %s11, 1
    %p92 = scmp.ne.s32.totalorder %s87, %s89
    %p93 = scmp.eq.s32.totalorder %s11, 0
    %p94 = por %p92, %p93
    %p95 = scmp.ne.s32.totalorder %s87, %s89
    %p96 = scmp.eq.s32.totalorder %s16, 1
    %p97 = por %p95, %p96
    %p98 = scmp.ne.s32.totalorder %s89, %s90
    %p99 = scmp.eq.s32.totalorder %s16, 0
    %p100 = por %p98, %p99
    %p101 = scmp.ne.s32.totalorder %s89, %s90
    %p102 = scmp.eq.s32.totalorder %s17, 1
    %p103 = por %p101, %p102
    %p105 = scmp.ne.s32.totalorder %s90, %s104
    %p106 = scmp.eq.s32.totalorder %s17, 0
    %p107 = por %p105, %p106
    %s109 = sadd.s32 %s108, 1
    %p112 = scmp.eq.s32.totalorder %s11, 1
    %p113 = scmp.ne.s32.totalorder %s108, %s110
    %p114 = scmp.eq.s32.totalorder %s11, 0
    %p115 = por %p113, %p114
    %p116 = scmp.ne.s32.totalorder %s108, %s110
    %p117 = scmp.eq.s32.totalorder %s16, 1
    %p118 = por %p116, %p117
    %p119 = scmp.ne.s32.totalorder %s110, %s111
    %p120 = scmp.eq.s32.totalorder %s16, 0
    %p121 = por %p119, %p120
    %p122 = scmp.ne.s32.totalorder %s110, %s111
    %p123 = scmp.eq.s32.totalorder %s17, 1
    %p124 = por %p122, %p123
    %p126 = scmp.ne.s32.totalorder %s111, %s125
    %p127 = scmp.eq.s32.totalorder %s17, 0
    %p128 = por %p126, %p127
    %s129 = ssub.s32 %s11, %s18
    %p130 = scmp.eq.s32.totalorder %s129, 0
    %s132 = sadd.s32 %s131, 1
    %s133 = scalar_select %p130, %s131, %s132
    %p136 = pneg %p130
    %p137 = scmp.eq.s32.totalorder %s11, 1
    %p138 = por %p136, %p137
    %p139 = scmp.ne.s32.totalorder %s131, %s134
    %p140 = scmp.eq.s32.totalorder %s11, 0
    %p141 = por %p139, %p140
    %p142 = scmp.ne.s32.totalorder %s131, %s134
    %p143 = scmp.eq.s32.totalorder %s16, 1
    %p144 = por %p142, %p143
    %p145 = scmp.ne.s32.totalorder %s134, %s135
    %p146 = scmp.eq.s32.totalorder %s16, 0
    %p147 = por %p145, %p146
    %p148 = scmp.ne.s32.totalorder %s134, %s135
    %p149 = scmp.eq.s32.totalorder %s17, 1
    %p150 = por %p148, %p149
    %p152 = scmp.ne.s32.totalorder %s135, %s151
    %p153 = scmp.eq.s32.totalorder %s17, 0
    %p154 = por %p152, %p153
    %p155 = scmp.le.s32.totalorder 1, %s11
    %p156 = scmp.lt.s32.totalorder %s11, 3
    %p157 = pnand %p155, %p156
    %p158 = pneg %p157
    // Predicated region
    $region9: #{patch_embed_forward.1} parent=5 // pred_check
      _
    $region10: #{patch_embed_forward.1} parent=5 // pred_check_branch
      %160 = sbr.rel (%p157) target = $region12
    $region11: #{patch_embed_forward.1} parent=5 // pred_region
      %s161 = ssub.s32 %s11, 1
      // Predicated region
      $region13: #{patch_embed_forward.1} parent=11 // pred_check
        %p162 = pneg %p58
      $region14: #{patch_embed_forward.1} parent=11 // pred_check_branch
        %164 = sbr.rel (%p162) target = $region16
      $region15: #{patch_embed_forward.1} parent=11 // pred_region
        _
      $region16: #{patch_embed_forward.1} parent=11 // pred_fallthru
        _
      // Predicated region
      $region17: #{patch_embed_forward.1} parent=11 // pred_check
        %p165 = pneg %p79
      $region18: #{patch_embed_forward.1} parent=11 // pred_check_branch
        %167 = sbr.rel (%p165) target = $region20
      $region19: #{patch_embed_forward.1} parent=11 // pred_region
        _
      $region20: #{patch_embed_forward.1} parent=11 // pred_fallthru
        _
      // Predicated region
      $region21: #{patch_embed_forward.1} parent=11 // pred_check
        %p168 = pneg %p100
      $region22: #{patch_embed_forward.1} parent=11 // pred_check_branch
        %170 = sbr.rel (%p168) target = $region24
      $region23: #{patch_embed_forward.1} parent=11 // pred_region
        _
      $region24: #{patch_embed_forward.1} parent=11 // pred_fallthru
        _
      // Predicated region
      $region25: #{patch_embed_forward.1} parent=11 // pred_check
        %p171 = pneg %p121
      $region26: #{patch_embed_forward.1} parent=11 // pred_check_branch
        %173 = sbr.rel (%p171) target = $region28
      $region27: #{patch_embed_forward.1} parent=11 // pred_region
        _
      $region28: #{patch_embed_forward.1} parent=11 // pred_fallthru
        _
    $region12: #{patch_embed_forward.1} parent=5 // pred_fallthru
      _
    %p174 = scmp.lt.s32.totalorder %s11, 2
    // Predicated region
    $region29: #{patch_embed_forward.1} parent=5 // pred_check
      %p175 = pneg %p174
    $region30: #{patch_embed_forward.1} parent=5 // pred_check_branch
      %177 = sbr.rel (%p175) target = $region32
    $region31: #{patch_embed_forward.1} parent=5 // pred_region
      // Predicated region
      $region33: #{patch_embed_forward.1} parent=31 // pred_check
        %p178 = pneg %p31
      $region34: #{patch_embed_forward.1} parent=31 // pred_check_branch
        %180 = sbr.rel (%p178) target = $region36
      $region35: #{patch_embed_forward.1} parent=31 // pred_region
        %p181 = scmp.lt.s32.totalorder %s11, 1
        %s182 = scalar_select %p181, %s11, 1
        %s183 = smul.addr %s182, 16
        %s184 = smul.addr %s183, 4
        %s185 = scalar_lea.vmem %s0, %s184
      $region36: #{patch_embed_forward.1} parent=31 // pred_fallthru
        _
    $region32: #{patch_embed_forward.1} parent=5 // pred_fallthru
      _
    %p186 = scmp.le.s32.totalorder 1, %s11
    %p187 = scmp.lt.s32.totalorder %s11, 3
    %p188 = pnand %p186, %p187
    %p189 = pneg %p188
    // Predicated region
    $region37: #{patch_embed_forward.1} parent=5 // pred_check
      _
    $region38: #{patch_embed_forward.1} parent=5 // pred_check_branch
      %191 = sbr.rel (%p188) target = $region40
    $region39: #{patch_embed_forward.1} parent=5 // pred_region
      %s192 = ssub.s32 %s11, 1
      %p193 = scmp.lt.s32.totalorder %s16, 1
      %s194 = scalar_select %p193, %s16, 1
      %s195 = smul.addr %s194, 16
      %s196 = smul.addr %s195, 4
      %s197 = scalar_lea.vmem %s0, %s196
      %p198 = pneg %p37
      %p199 = pneg %p34
      %p200 = pneg %p58
      %p201 = pneg %p55
      %p202 = pneg %p79
      %p203 = pneg %p76
      %p204 = pneg %p100
      %p205 = pneg %p97
      %p206 = pneg %p121
      %p207 = pneg %p118
      %p208 = pneg %p147
      %p209 = pneg %p144
      %p210 = scmp.lt.s32.totalorder %s16, 1
      %s211 = scalar_select %p210, %s16, 1
      %s212 = smul.addr %s211, 4
      %s213 = smul.addr %s212, 8
      %s214 = scalar_lea.vmem %s5, %s213
      %p215 = scmp.lt.s32.totalorder %s16, 1
      %s216 = scalar_select %p215, %s16, 1
      %s217 = smul.addr %s216, 16
      %s218 = smul.addr %s217, 4
      %s219 = scalar_lea.vmem %s0, %s218
      %p220 = scmp.lt.s32.totalorder %s16, 1
      %s221 = scalar_select %p220, %s16, 1
      %s222 = smul.addr %s221, 4
      %s223 = smul.addr %s222, 8
      %s224 = scalar_lea.vmem %s5, %s223
      %vm226 = vcmask 257024
      %227 = vst.msk [vmem:[#allocation2] sm:$0xf] %vm226, 0
      %s228 = scalar_lea.vmem [#allocation2], 20
      %229 = vst.msk [vmem:[%s228] sm:$0xf] %vm226, 0
      %s230 = scalar_lea.vmem [#allocation2], 40
      %231 = vst.msk [vmem:[%s230] sm:$0xf] %vm226, 0
      %s232 = scalar_lea.vmem [#allocation2], 60
      %233 = vst.msk [vmem:[%s232] sm:$0xf] %vm226, 0
      %s234 = scalar_lea.vmem [#allocation2], 80
      %235 = vst.msk [vmem:[%s234] sm:$0xf] %vm226, 0
      %s236 = scalar_lea.vmem [#allocation2], 100
      %237 = vst.msk [vmem:[%s236] sm:$0xf] %vm226, 0
      %v238 = vlaneseq
      %v239 = vshrl.u32 %v238, 7
      %v240 = vadd.s32 %v239, 8
      %v241 = vadd.s32 %v239, 16
      %v242 = vadd.s32 %v239, 24
      %vm243 = vcmp.lt.s32.totalorder %v239, 0
      %v244 = vsub.s32 0, %v239
      %v245 = vsel %vm243, %v244, %v239
      %v246 = vshrl.u32 %v245, 3
      %v247 = vand.u32 %v245, 7
      %v248 = vsub.s32 0, %v247
      %v249 = vsel %vm243, %v248, %v247
      %vm250 = vcmp.lt.s32.totalorder %v240, 0
      %v251 = vsub.s32 0, %v240
      %v252 = vsel %vm250, %v251, %v240
      %v253 = vshrl.u32 %v252, 3
      %v254 = vand.u32 %v252, 7
      %v255 = vsub.s32 0, %v254
      %v256 = vsel %vm250, %v255, %v254
      %vm257 = vcmp.lt.s32.totalorder %v241, 0
      %v258 = vsub.s32 0, %v241
      %v259 = vsel %vm257, %v258, %v241
      %v260 = vshrl.u32 %v259, 3
      %v261 = vand.u32 %v259, 7
      %v262 = vsub.s32 0, %v261
      %v263 = vsel %vm257, %v262, %v261
      %vm264 = vcmp.lt.s32.totalorder %v242, 0
      %v265 = vsub.s32 0, %v242
      %v266 = vsel %vm264, %v265, %v242
      %v267 = vshrl.u32 %v266, 3
      %v268 = vand.u32 %v266, 7
      %v269 = vsub.s32 0, %v268
      %v270 = vsel %vm264, %v269, %v268
      %vm271 = vcmp.ne.s32.totalorder %v249, 0
      %vm272 = vcmp.ne.s32.totalorder %v256, 0
      %vm273 = vcmp.ne.s32.totalorder %v263, 0
      %vm274 = vcmp.ne.s32.totalorder %v270, 0
      %vm275 = vcmp.lt.s32.totalorder %v249, 0
      %vm276 = vcmp.lt.s32.totalorder %v256, 0
      %vm277 = vcmp.lt.s32.totalorder %v263, 0
      %vm278 = vcmp.lt.s32.totalorder %v270, 0
      %vm279 = vmand %vm275, %vm271
      %vm280 = vmand %vm276, %vm272
      %vm281 = vmand %vm277, %vm273
      %vm282 = vmand %vm278, %vm274
      %v283 = vadd.s32 %v249, 8
      %v284 = vadd.s32 %v256, 8
      %v285 = vadd.s32 %v263, 8
      %v286 = vadd.s32 %v270, 8
      %v287 = vsel %vm279, %v283, %v249
      %v288 = vsel %vm280, %v284, %v256
      %v289 = vsel %vm281, %v285, %v263
      %v290 = vsel %vm282, %v286, %v270
      %vm291 = vcmp.ne.s32.totalorder %v287, 0
      %vm292 = vcmp.ne.s32.totalorder %v288, 0
      %vm293 = vcmp.ne.s32.totalorder %v289, 0
      %vm294 = vcmp.ne.s32.totalorder %v290, 0
      %v295 = vsel %vm291, 1, 0
      %v296 = vsel %vm292, 1, 0
      %v297 = vsel %vm293, 1, 0
      %v298 = vsel %vm294, 1, 0
      %v299 = vcvt.s32.f32 %v295
      %v300 = vcvt.s32.f32 %v296
      %v301 = vcvt.s32.f32 %v297
      %v302 = vcvt.s32.f32 %v298
      %v303 = vld [vmem:[%s1] sm:$0xf]
      %v304 = vld [vmem:[%s1 + $0x4] sm:$0xf]
      %v305 = vld [vmem:[%s1 + $0x8] sm:$0xf]
      %v306 = vld [vmem:[%s1 + $0xc] sm:$0xf]
      %v307 = vld [vmem:[%s1 + $0x10] sm:$0x3]
      %v308 = vld [vmem:[%s2] sm:$0x1]
      %v309 = vld [vmem:[%s219] sm:$0xf]
      %v310 = vld [vmem:[%s219 + $0x4] sm:$0xf]
      %v311 = vld [vmem:[%s219 + $0x8] sm:$0xf]
      %v312 = vld [vmem:[%s219 + $0xc] sm:$0xf]
      %v314 = vlaneseq
      %v315 = vshrl.u32 %v314, 7
      %v316 = vsub.s32 0, %v315
      %v317 = vrot.slane %v308, %v316
      %v323 = vunpack.c.l.b16 %v309
      %v324 = vunpack.c.l.b16 %v310
      %v325 = vunpack.c.l.b16 %v311
      %v326 = vunpack.c.l.b16 %v312
      %v327 = vpack.c.b16 %v324, %v323
      %v328 = vpack.c.b16 %v326, %v325
      %v334 = vunpack.c.l.b16 %v303
      %v335 = vunpack.c.l.b16 %v304
      %v336 = vunpack.c.l.b16 %v305
      %v337 = vunpack.c.l.b16 %v306
      %v338 = vunpack.c.l.b16 %v307
      %v339 = vpack.c.b16 %v335, %v334
      %v340 = vpack.c.b16 %v337, %v336
      %v341 = vpack.c.b16 %v338, %v338
      %vm344 = vcmask 293888
      %v346 = vsel %vm344, %v327, 0
      %v349 = vsel %vm344, %v328, 0
      %vm351 = vcmask 1041408
      %v353 = vsel %vm351, %v341, 0
      %355 = vmatprep.subr.bf16.mxu0 0
      %356 = vmatpush1.bf16.msra.mxu0 %v339
      %357 = vmatprep.subr.bf16.mxu0 0
      %358 = vmatpush1.bf16.msra.mxu0 %v340
      %359 = vmatprep.subr.bf16.mxu0 0
      %360 = vmatpush1.bf16.msra.mxu0 %v353
      %361 = vmatprep.subr.bf16.mxu0 0
      %362 = vmatpush1.bf16.msra.mxu0 0
      %363 = vmatprep.subr.bf16.mxu0 0
      %364 = vmatpush1.bf16.msra.mxu0 0
      %365 = vmatprep.subr.bf16.mxu0 0
      %366 = vmatpush1.bf16.msra.mxu0 0
      %367 = vmatprep.subr.bf16.mxu0 0
      %368 = vmatpush1.bf16.msra.mxu0 0
      %369 = vmatprep.subr.bf16.mxu0 0
      %370 = vmatpush1.bf16.msra.mxu0 0
      %371 = vmatprep.subr.bf16.mxu0 0
      %372 = vmatpush1.bf16.msra.mxu0 0
      %373 = vmatprep.subr.bf16.mxu0 0
      %374 = vmatpush1.bf16.msra.mxu0 0
      %375 = vmatprep.subr.bf16.mxu0 0
      %376 = vmatpush1.bf16.msra.mxu0 0
      %377 = vmatprep.subr.bf16.mxu0 0
      %378 = vmatpush1.bf16.msra.mxu0 0
      %379 = vmatprep.subr.bf16.mxu0 0
      %380 = vmatpush1.bf16.msra.mxu0 0
      %381 = vmatprep.subr.bf16.mxu0 0
      %382 = vmatpush1.bf16.msra.mxu0 0
      %383 = vmatprep.subr.bf16.mxu0 0
      %384 = vmatpush1.bf16.msra.mxu0 0
      %385 = vmatprep.subr.bf16.mxu0 0
      %386 = vmatpush1.bf16.msra.mxu0 0
      %387 = vmatprep.mubr.bf16.mxu0 0
      %388 = vmatmul.mubr.bf16.gmra.mrb[0].mxu0 %v346
      %v389 = vpop.f32.mrb[0].mxu0
      %v390 = vadd.f32 %v317, %v389
      %v391 = vpop.f32.mrb[0].mxu0
      %v392 = vpop.f32.mrb[0].mxu0
      %v393 = vadd.f32 %v317, %v392
      %v394 = vpop.f32.mrb[0].mxu0
      %395 = vmatprep.mubr.bf16.mxu0 0
      %396 = vmatmul.mubr.bf16.gmra.mrb[0].mxu0 %v349
      %v397 = vpop.f32.mrb[0].mxu0
      %v398 = vadd.f32 %v317, %v397
      %v399 = vpop.f32.mrb[0].mxu0
      %v400 = vpop.f32.mrb[0].mxu0
      %v401 = vadd.f32 %v317, %v400
      %v402 = vpop.f32.mrb[0].mxu0
      %403 = vdwg.mxu0
      %v404 = vmax.f32 %v390, 0.0
      %v405 = vmax.f32 %v393, 0.0
      %v406 = vmax.f32 %v398, 0.0
      %v407 = vmax.f32 %v401, 0.0
      %v408 = vpack.c.bf16 %v405, %v404
      %v409 = vpack.c.bf16 %v407, %v406
      %v412 = vunpack.c.l.b16 %v408
      %v413 = vunpack.c.h.b16 %v408
      %v414 = vunpack.c.l.b16 %v409
      %v415 = vunpack.c.h.b16 %v409
      %v416 = vpack.c.b16 %v412, %v412
      %v417 = vpack.c.b16 %v413, %v413
      %v418 = vpack.c.b16 %v414, %v414
      %v419 = vpack.c.b16 %v415, %v415
      %424 = vst.msk [vmem:[%s228 + $0x4] sm:$0xf] %vm226, %v416
      %425 = vst.msk [vmem:[%s228 + $0x8] sm:$0xf] %vm226, %v417
      %426 = vst.msk [vmem:[%s228 + $0xc] sm:$0xf] %vm226, %v418
      %427 = vst.msk [vmem:[%s228 + $0x10] sm:$0xf] %vm226, %v419
      %s428 = scalar_lea.vmem %s219, 16
      %v429 = vld [vmem:[%s428] sm:$0xf]
      %v430 = vld [vmem:[%s428 + $0x4] sm:$0xf]
      %v431 = vld [vmem:[%s428 + $0x8] sm:$0xf]
      %v432 = vld [vmem:[%s428 + $0xc] sm:$0xf]
      %v437 = vunpack.c.l.b16 %v429
      %v438 = vunpack.c.l.b16 %v430
      %v439 = vunpack.c.l.b16 %v431
      %v440 = vunpack.c.l.b16 %v432
      %v441 = vpack.c.b16 %v438, %v437
      %v442 = vpack.c.b16 %v440, %v439
      %v444 = vsel %vm344, %v441, 0
      %v447 = vsel %vm344, %v442, 0
      %449 = vmatprep.subr.bf16.mxu0 0
      %450 = vmatpush1.bf16.msra.mxu0 %v339
      %451 = vmatprep.subr.bf16.mxu0 0
      %452 = vmatpush1.bf16.msra.mxu0 %v340
      %453 = vmatprep.subr.bf16.mxu0 0
      %454 = vmatpush1.bf16.msra.mxu0 %v353
      %455 = vmatprep.subr.bf16.mxu0 0
      %456 = vmatpush1.bf16.msra.mxu0 0
      %457 = vmatprep.subr.bf16.mxu0 0
      %458 = vmatpush1.bf16.msra.mxu0 0
      %459 = vmatprep.subr.bf16.mxu0 0
      %460 = vmatpush1.bf16.msra.mxu0 0
      %461 = vmatprep.subr.bf16.mxu0 0
      %462 = vmatpush1.bf16.msra.mxu0 0
      %463 = vmatprep.subr.bf16.mxu0 0
      %464 = vmatpush1.bf16.msra.mxu0 0
      %465 = vmatprep.subr.bf16.mxu0 0
      %466 = vmatpush1.bf16.msra.mxu0 0
      %467 = vmatprep.subr.bf16.mxu0 0
      %468 = vmatpush1.bf16.msra.mxu0 0
      %469 = vmatprep.subr.bf16.mxu0 0
      %470 = vmatpush1.bf16.msra.mxu0 0
      %471 = vmatprep.subr.bf16.mxu0 0
      %472 = vmatpush1.bf16.msra.mxu0 0
      %473 = vmatprep.subr.bf16.mxu0 0
      %474 = vmatpush1.bf16.msra.mxu0 0
      %475 = vmatprep.subr.bf16.mxu0 0
      %476 = vmatpush1.bf16.msra.mxu0 0
      %477 = vmatprep.subr.bf16.mxu0 0
      %478 = vmatpush1.bf16.msra.mxu0 0
      %479 = vmatprep.subr.bf16.mxu0 0
      %480 = vmatpush1.bf16.msra.mxu0 0
      %481 = vmatprep.mubr.bf16.mxu0 0
      %482 = vmatmul.mubr.bf16.gmra.mrb[0].mxu0 %v444
      %v483 = vpop.f32.mrb[0].mxu0
      %v484 = vadd.f32 %v317, %v483
      %v485 = vpop.f32.mrb[0].mxu0
      %v486 = vpop.f32.mrb[0].mxu0
      %v487 = vadd.f32 %v317, %v486
      %v488 = vpop.f32.mrb[0].mxu0
      %489 = vmatprep.mubr.bf16.mxu0 0
      %490 = vmatmul.mubr.bf16.gmra.mrb[0].mxu0 %v447
      %v491 = vpop.f32.mrb[0].mxu0
      %v492 = vadd.f32 %v317, %v491
      %v493 = vpop.f32.mrb[0].mxu0
      %v494 = vpop.f32.mrb[0].mxu0
      %v495 = vadd.f32 %v317, %v494
      %v496 = vpop.f32.mrb[0].mxu0
      %497 = vdwg.mxu0
      %v498 = vmax.f32 %v484, 0.0
      %v499 = vmax.f32 %v487, 0.0
      %v500 = vmax.f32 %v492, 0.0
      %v501 = vmax.f32 %v495, 0.0
      %v502 = vpack.c.bf16 %v499, %v498
      %v503 = vpack.c.bf16 %v501, %v500
      %v506 = vunpack.c.l.b16 %v502
      %v507 = vunpack.c.h.b16 %v502
      %v508 = vunpack.c.l.b16 %v503
      %v509 = vunpack.c.h.b16 %v503
      %v510 = vpack.c.b16 %v506, %v506
      %v511 = vpack.c.b16 %v507, %v507
      %v512 = vpack.c.b16 %v508, %v508
      %v513 = vpack.c.b16 %v509, %v509
      %518 = vst.msk [vmem:[%s230 + $0x4] sm:$0xf] %vm226, %v510
      %519 = vst.msk [vmem:[%s230 + $0x8] sm:$0xf] %vm226, %v511
      %520 = vst.msk [vmem:[%s230 + $0xc] sm:$0xf] %vm226, %v512
      %521 = vst.msk [vmem:[%s230 + $0x10] sm:$0xf] %vm226, %v513
      %v522 = vrot.slane %v498, 7
      %v523 = vrot.slane %v499, 7
      %v524 = vrot.slane %v500, 7
      %v525 = vrot.slane %v501, 7
      %vm526 = vcmp.lt.s32.totalorder %v239, 1
      %v527 = vsel %vm526, %v524, %v525
      %v528 = vsel %vm526, %v523, %v524
      %v529 = vsel %vm526, %v522, %v523
      %v530 = vsel %vm526, %v525, %v522
      %v531 = vmul.f32 %v530, %v299
      %v532 = vmul.f32 %v529, %v300
      %v533 = vmul.f32 %v528, %v301
      %v534 = vmul.f32 %v527, %v302
      %v535 = vpack.c.bf16 %v532, %v531
      %v536 = vpack.c.bf16 %v534, %v533
      %v539 = vunpack.c.l.b16 %v535
      %v540 = vunpack.c.h.b16 %v535
      %v541 = vunpack.c.l.b16 %v536
      %v542 = vunpack.c.h.b16 %v536
      %v543 = vpack.c.b16 %v539, %v539
      %v544 = vpack.c.b16 %v540, %v540
      %v545 = vpack.c.b16 %v541, %v541
      %v546 = vpack.c.b16 %v542, %v542
      %551 = vst.msk [vmem:[#allocation2 + $0x4] sm:$0xf] %vm226, %v543
      %552 = vst.msk [vmem:[#allocation2 + $0x8] sm:$0xf] %vm226, %v544
      %553 = vst.msk [vmem:[#allocation2 + $0xc] sm:$0xf] %vm226, %v545
      %554 = vst.msk [vmem:[#allocation2 + $0x10] sm:$0xf] %vm226, %v546
      %s555 = scalar_lea.vmem %s219, 32
      %v556 = vld [vmem:[%s555] sm:$0xf]
      %v557 = vld [vmem:[%s555 + $0x4] sm:$0xf]
      %v558 = vld [vmem:[%s555 + $0x8] sm:$0xf]
      %v559 = vld [vmem:[%s555 + $0xc] sm:$0xf]
      %v564 = vunpack.c.l.b16 %v556
      %v565 = vunpack.c.l.b16 %v557
      %v566 = vunpack.c.l.b16 %v558
      %v567 = vunpack.c.l.b16 %v559
      %v568 = vpack.c.b16 %v565, %v564
      %v569 = vpack.c.b16 %v567, %v566
      %v571 = vsel %vm344, %v568, 0
      %v574 = vsel %vm344, %v569, 0
      %576 = vmatprep.subr.bf16.mxu0 0
      %577 = vmatpush1.bf16.msra.mxu0 %v339
      %578 = vmatprep.subr.bf16.mxu0 0
      %579 = vmatpush1.bf16.msra.mxu0 %v340
      %580 = vmatprep.subr.bf16.mxu0 0
      %581 = vmatpush1.bf16.msra.mxu0 %v353
      %582 = vmatprep.subr.bf16.mxu0 0
      %583 = vmatpush1.bf16.msra.mxu0 0
      %584 = vmatprep.subr.bf16.mxu0 0
      %585 = vmatpush1.bf16.msra.mxu0 0
      %586 = vmatprep.subr.bf16.mxu0 0
      %587 = vmatpush1.bf16.msra.mxu0 0
      %588 = vmatprep.subr.bf16.mxu0 0
      %589 = vmatpush1.bf16.msra.mxu0 0
      %590 = vmatprep.subr.bf16.mxu0 0
      %591 = vmatpush1.bf16.msra.mxu0 0
      %592 = vmatprep.subr.bf16.mxu0 0
      %593 = vmatpush1.bf16.msra.mxu0 0
      %594 = vmatprep.subr.bf16.mxu0 0
      %595 = vmatpush1.bf16.msra.mxu0 0
      %596 = vmatprep.subr.bf16.mxu0 0
      %597 = vmatpush1.bf16.msra.mxu0 0
      %598 = vmatprep.subr.bf16.mxu0 0
      %599 = vmatpush1.bf16.msra.mxu0 0
      %600 = vmatprep.subr.bf16.mxu0 0
      %601 = vmatpush1.bf16.msra.mxu0 0
      %602 = vmatprep.subr.bf16.mxu0 0
      %603 = vmatpush1.bf16.msra.mxu0 0
      %604 = vmatprep.subr.bf16.mxu0 0
      %605 = vmatpush1.bf16.msra.mxu0 0
      %606 = vmatprep.subr.bf16.mxu0 0
      %607 = vmatpush1.bf16.msra.mxu0 0
      %608 = vmatprep.mubr.bf16.mxu0 0
      %609 = vmatmul.mubr.bf16.gmra.mrb[0].mxu0 %v571
      %v610 = vpop.f32.mrb[0].mxu0
      %v611 = vadd.f32 %v317, %v610
      %v612 = vpop.f32.mrb[0].mxu0
      %v613 = vpop.f32.mrb[0].mxu0
      %v614 = vadd.f32 %v317, %v613
      %v615 = vpop.f32.mrb[0].mxu0
      %616 = vmatprep.mubr.bf16.mxu0 0
      %617 = vmatmul.mubr.bf16.gmra.mrb[0].mxu0 %v574
      %v618 = vpop.f32.mrb[0].mxu0
      %v619 = vadd.f32 %v317, %v618
      %v620 = vpop.f32.mrb[0].mxu0
      %v621 = vpop.f32.mrb[0].mxu0
      %v622 = vadd.f32 %v317, %v621
      %v623 = vpop.f32.mrb[0].mxu0
      %624 = vdwg.mxu0
      %v625 = vmax.f32 %v611, 0.0
      %v626 = vmax.f32 %v614, 0.0
      %v627 = vmax.f32 %v619, 0.0
      %v628 = vmax.f32 %v622, 0.0
      %v629 = vpack.c.bf16 %v626, %v625
      %v630 = vpack.c.bf16 %v628, %v627
      %v633 = vunpack.c.l.b16 %v629
      %v634 = vunpack.c.h.b16 %v629
      %v635 = vunpack.c.l.b16 %v630
      %v636 = vunpack.c.h.b16 %v630
      %v637 = vpack.c.b16 %v633, %v633
      %v638 = vpack.c.b16 %v634, %v634
      %v639 = vpack.c.b16 %v635, %v635
      %v640 = vpack.c.b16 %v636, %v636
      %645 = vst.msk [vmem:[%s234 + $0x4] sm:$0xf] %vm226, %v637
      %646 = vst.msk [vmem:[%s234 + $0x8] sm:$0xf] %vm226, %v638
      %647 = vst.msk [vmem:[%s234 + $0xc] sm:$0xf] %vm226, %v639
      %648 = vst.msk [vmem:[%s234 + $0x10] sm:$0xf] %vm226, %v640
      %s649 = scalar_lea.vmem %s219, 48
      %v650 = vld [vmem:[%s649] sm:$0xf]
      %v651 = vld [vmem:[%s649 + $0x4] sm:$0xf]
      %v652 = vld [vmem:[%s649 + $0x8] sm:$0xf]
      %v653 = vld [vmem:[%s649 + $0xc] sm:$0xf]
      %v658 = vunpack.c.l.b16 %v650
      %v659 = vunpack.c.l.b16 %v651
      %v660 = vunpack.c.l.b16 %v652
      %v661 = vunpack.c.l.b16 %v653
      %v662 = vpack.c.b16 %v659, %v658
      %v663 = vpack.c.b16 %v661, %v660
      %v665 = vsel %vm344, %v662, 0
      %v668 = vsel %vm344, %v663, 0
      %670 = vmatprep.subr.bf16.mxu0 0
      %671 = vmatpush1.bf16.msra.mxu0 %v339
      %672 = vmatprep.subr.bf16.mxu0 0
      %673 = vmatpush1.bf16.msra.mxu0 %v340
      %674 = vmatprep.subr.bf16.mxu0 0
      %675 = vmatpush1.bf16.msra.mxu0 %v353
      %676 = vmatprep.subr.bf16.mxu0 0
      %677 = vmatpush1.bf16.msra.mxu0 0
      %678 = vmatprep.subr.bf16.mxu0 0
      %679 = vmatpush1.bf16.msra.mxu0 0
      %680 = vmatprep.subr.bf16.mxu0 0
      %681 = vmatpush1.bf16.msra.mxu0 0
      %682 = vmatprep.subr.bf16.mxu0 0
      %683 = vmatpush1.bf16.msra.mxu0 0
      %684 = vmatprep.subr.bf16.mxu0 0
      %685 = vmatpush1.bf16.msra.mxu0 0
      %686 = vmatprep.subr.bf16.mxu0 0
      %687 = vmatpush1.bf16.msra.mxu0 0
      %688 = vmatprep.subr.bf16.mxu0 0
      %689 = vmatpush1.bf16.msra.mxu0 0
      %690 = vmatprep.subr.bf16.mxu0 0
      %691 = vmatpush1.bf16.msra.mxu0 0
      %692 = vmatprep.subr.bf16.mxu0 0
      %693 = vmatpush1.bf16.msra.mxu0 0
      %694 = vmatprep.subr.bf16.mxu0 0
      %695 = vmatpush1.bf16.msra.mxu0 0
      %696 = vmatprep.subr.bf16.mxu0 0
      %697 = vmatpush1.bf16.msra.mxu0 0
      %698 = vmatprep.subr.bf16.mxu0 0
      %699 = vmatpush1.bf16.msra.mxu0 0
      %700 = vmatprep.subr.bf16.mxu0 0
      %701 = vmatpush1.bf16.msra.mxu0 0
      %702 = vmatprep.mubr.bf16.mxu0 0
      %703 = vmatmul.mubr.bf16.gmra.mrb[0].mxu0 %v665
      %v704 = vpop.f32.mrb[0].mxu0
      %v705 = vadd.f32 %v317, %v704
      %v706 = vpop.f32.mrb[0].mxu0
      %v707 = vpop.f32.mrb[0].mxu0
      %v708 = vadd.f32 %v317, %v707
      %v709 = vpop.f32.mrb[0].mxu0
      %710 = vmatprep.mubr.bf16.mxu0 0
      %711 = vmatmul.mubr.bf16.gmra.mrb[0].mxu0 %v668
      %v712 = vpop.f32.mrb[0].mxu0
      %v713 = vadd.f32 %v317, %v712
      %v714 = vpop.f32.mrb[0].mxu0
      %v715 = vpop.f32.mrb[0].mxu0
      %v716 = vadd.f32 %v317, %v715
      %v717 = vpop.f32.mrb[0].mxu0
      %718 = vdwg.mxu0
      %v719 = vmax.f32 %v705, 0.0
      %v720 = vmax.f32 %v708, 0.0
      %v721 = vmax.f32 %v713, 0.0
      %v722 = vmax.f32 %v716, 0.0
      %v723 = vpack.c.bf16 %v720, %v719
      %v724 = vpack.c.bf16 %v722, %v721
      %v727 = vunpack.c.l.b16 %v723
      %v728 = vunpack.c.h.b16 %v723
      %v729 = vunpack.c.l.b16 %v724
      %v730 = vunpack.c.h.b16 %v724
      %v731 = vpack.c.b16 %v727, %v727
      %v732 = vpack.c.b16 %v728, %v728
      %v733 = vpack.c.b16 %v729, %v729
      %v734 = vpack.c.b16 %v730, %v730
      %739 = vst.msk [vmem:[%s236 + $0x4] sm:$0xf] %vm226, %v731
      %740 = vst.msk [vmem:[%s236 + $0x8] sm:$0xf] %vm226, %v732
      %741 = vst.msk [vmem:[%s236 + $0xc] sm:$0xf] %vm226, %v733
      %742 = vst.msk [vmem:[%s236 + $0x10] sm:$0xf] %vm226, %v734
      %v743 = vrot.slane %v719, 7
      %v744 = vrot.slane %v720, 7
      %v745 = vrot.slane %v721, 7
      %v746 = vrot.slane %v722, 7
      %v747 = vsel %vm526, %v745, %v746
      %v748 = vsel %vm526, %v744, %v745
      %v749 = vsel %vm526, %v743, %v744
      %v750 = vsel %vm526, %v746, %v743
      %v751 = vmul.f32 %v750, %v299
      %v752 = vmul.f32 %v749, %v300
      %v753 = vmul.f32 %v748, %v301
      %v754 = vmul.f32 %v747, %v302
      %v755 = vpack.c.bf16 %v752, %v751
      %v756 = vpack.c.bf16 %v754, %v753
      %v759 = vunpack.c.l.b16 %v755
      %v760 = vunpack.c.h.b16 %v755
      %v761 = vunpack.c.l.b16 %v756
      %v762 = vunpack.c.h.b16 %v756
      %v763 = vpack.c.b16 %v759, %v759
      %v764 = vpack.c.b16 %v760, %v760
      %v765 = vpack.c.b16 %v761, %v761
      %v766 = vpack.c.b16 %v762, %v762
      %771 = vst.msk [vmem:[%s232 + $0x4] sm:$0xf] %vm226, %v763
      %772 = vst.msk [vmem:[%s232 + $0x8] sm:$0xf] %vm226, %v764
      %773 = vst.msk [vmem:[%s232 + $0xc] sm:$0xf] %vm226, %v765
      %774 = vst.msk [vmem:[%s232 + $0x10] sm:$0xf] %vm226, %v766
      %v775 = vld [vmem:[%s232] sm:$0xf]
      %v776 = vld [vmem:[%s232 + $0x4] sm:$0xf]
      %v777 = vld [vmem:[%s232 + $0x8] sm:$0xf]
      %v778 = vld [vmem:[%s232 + $0xc] sm:$0xf]
      %v779 = vld [vmem:[%s3] sm:$0xf]
      %v780 = vld [vmem:[%s3 + $0x4] sm:$0xf]
      %v781 = vld [vmem:[%s3 + $0x8] sm:$0xf]
      %v782 = vld [vmem:[%s3 + $0xc] sm:$0xf]
      %v783 = vld [vmem:[%s234] sm:$0xf]
      %v784 = vld [vmem:[%s234 + $0x4] sm:$0xf]
      %v785 = vld [vmem:[%s234 + $0x8] sm:$0xf]
      %v786 = vld [vmem:[%s234 + $0xc] sm:$0xf]
      %s787 = scalar_lea.vmem %s3, 16
      %v788 = vld [vmem:[%s787] sm:$0xf]
      %v789 = vld [vmem:[%s787 + $0x4] sm:$0xf]
      %v790 = vld [vmem:[%s787 + $0x8] sm:$0xf]
      %v791 = vld [vmem:[%s787 + $0xc] sm:$0xf]
      %v796 = vunpack.c.l.b16 %v783
      %v797 = vunpack.c.l.b16 %v784
      %v798 = vunpack.c.l.b16 %v785
      %v799 = vunpack.c.l.b16 %v786
      %v800 = vpack.c.b16 %v797, %v796
      %v801 = vpack.c.b16 %v799, %v798
      %v806 = vunpack.c.l.b16 %v788
      %v807 = vunpack.c.l.b16 %v789
      %v808 = vunpack.c.l.b16 %v790
      %v809 = vunpack.c.l.b16 %v791
      %v810 = vpack.c.b16 %v807, %v806
      %v811 = vpack.c.b16 %v809, %v808
      %vm814 = vcmask 261120
      %v816 = vsel %vm814, %v800, 0
      %v819 = vsel %vm814, %v801, 0
      %821 = vmatprep.subr.bf16.mxu0 0
      %822 = vmatpush1.bf16.msra.mxu0 %v810
      %823 = vmatprep.subr.bf16.mxu0 0
      %824 = vmatpush1.bf16.msra.mxu0 %v811
      %825 = vmatprep.subr.bf16.mxu0 0
      %826 = vmatpush1.bf16.msra.mxu0 0
      %827 = vmatprep.subr.bf16.mxu0 0
      %828 = vmatpush1.bf16.msra.mxu0 0
      %829 = vmatprep.subr.bf16.mxu0 0
      %830 = vmatpush1.bf16.msra.mxu0 0
      %831 = vmatprep.subr.bf16.mxu0 0
      %832 = vmatpush1.bf16.msra.mxu0 0
      %833 = vmatprep.subr.bf16.mxu0 0
      %834 = vmatpush1.bf16.msra.mxu0 0
      %835 = vmatprep.subr.bf16.mxu0 0
      %836 = vmatpush1.bf16.msra.mxu0 0
      %837 = vmatprep.subr.bf16.mxu0 0
      %838 = vmatpush1.bf16.msra.mxu0 0
      %839 = vmatprep.subr.bf16.mxu0 0
      %840 = vmatpush1.bf16.msra.mxu0 0
      %841 = vmatprep.subr.bf16.mxu0 0
      %842 = vmatpush1.bf16.msra.mxu0 0
      %843 = vmatprep.subr.bf16.mxu0 0
      %844 = vmatpush1.bf16.msra.mxu0 0
      %845 = vmatprep.subr.bf16.mxu0 0
      %846 = vmatpush1.bf16.msra.mxu0 0
      %847 = vmatprep.subr.bf16.mxu0 0
      %848 = vmatpush1.bf16.msra.mxu0 0
      %849 = vmatprep.subr.bf16.mxu0 0
      %850 = vmatpush1.bf16.msra.mxu0 0
      %851 = vmatprep.subr.bf16.mxu0 0
      %852 = vmatpush1.bf16.msra.mxu0 0
      %853 = vmatprep.mubr.bf16.mxu0 0
      %854 = vmatmul.mubr.bf16.gmra.mrb[0].mxu0 %v816
      %v855 = vpop.f32.mrb[0].mxu0
      %v856 = vadd.f32 0.0, %v855
      %v857 = vpop.f32.mrb[0].mxu0
      %v858 = vpop.f32.mrb[0].mxu0
      %v859 = vadd.f32 0.0, %v858
      %v860 = vpop.f32.mrb[0].mxu0
      %861 = vmatprep.mubr.bf16.mxu0 0
      %862 = vmatmul.mubr.bf16.gmra.mrb[0].mxu0 %v819
      %v863 = vpop.f32.mrb[0].mxu0
      %v864 = vadd.f32 0.0, %v863
      %v865 = vpop.f32.mrb[0].mxu0
      %v866 = vpop.f32.mrb[0].mxu0
      %v867 = vadd.f32 0.0, %v866
      %v868 = vpop.f32.mrb[0].mxu0
      %869 = vdwg.mxu0
      %v874 = vunpack.c.l.b16 %v775
      %v875 = vunpack.c.l.b16 %v776
      %v876 = vunpack.c.l.b16 %v777
      %v877 = vunpack.c.l.b16 %v778
      %v878 = vpack.c.b16 %v875, %v874
      %v879 = vpack.c.b16 %v877, %v876
      %v884 = vunpack.c.l.b16 %v779
      %v885 = vunpack.c.l.b16 %v780
      %v886 = vunpack.c.l.b16 %v781
      %v887 = vunpack.c.l.b16 %v782
      %v888 = vpack.c.b16 %v885, %v884
      %v889 = vpack.c.b16 %v887, %v886
      %v893 = vsel %vm814, %v878, 0
      %v896 = vsel %vm814, %v879, 0
      %898 = vmatprep.subr.bf16.mxu0 0
      %899 = vmatpush1.bf16.msra.mxu0 %v888
      %900 = vmatprep.subr.bf16.mxu0 0
      %901 = vmatpush1.bf16.msra.mxu0 %v889
      %902 = vmatprep.subr.bf16.mxu0 0
      %903 = vmatpush1.bf16.msra.mxu0 0
      %904 = vmatprep.subr.bf16.mxu0 0
      %905 = vmatpush1.bf16.msra.mxu0 0
      %906 = vmatprep.subr.bf16.mxu0 0
      %907 = vmatpush1.bf16.msra.mxu0 0
      %908 = vmatprep.subr.bf16.mxu0 0
      %909 = vmatpush1.bf16.msra.mxu0 0
      %910 = vmatprep.subr.bf16.mxu0 0
      %911 = vmatpush1.bf16.msra.mxu0 0
      %912 = vmatprep.subr.bf16.mxu0 0
      %913 = vmatpush1.bf16.msra.mxu0 0
      %914 = vmatprep.subr.bf16.mxu0 0
      %915 = vmatpush1.bf16.msra.mxu0 0
      %916 = vmatprep.subr.bf16.mxu0 0
      %917 = vmatpush1.bf16.msra.mxu0 0
      %918 = vmatprep.subr.bf16.mxu0 0
      %919 = vmatpush1.bf16.msra.mxu0 0
      %920 = vmatprep.subr.bf16.mxu0 0
      %921 = vmatpush1.bf16.msra.mxu0 0
      %922 = vmatprep.subr.bf16.mxu0 0
      %923 = vmatpush1.bf16.msra.mxu0 0
      %924 = vmatprep.subr.bf16.mxu0 0
      %925 = vmatpush1.bf16.msra.mxu0 0
      %926 = vmatprep.subr.bf16.mxu0 0
      %927 = vmatpush1.bf16.msra.mxu0 0
      %928 = vmatprep.subr.bf16.mxu0 0
      %929 = vmatpush1.bf16.msra.mxu0 0
      %930 = vmatprep.mubr.bf16.mxu0 0
      %931 = vmatmul.mubr.bf16.gmra.mrb[0].mxu0 %v893
      %v932 = vpop.f32.mrb[0].mxu0
      %v933 = vadd.f32 %v856, %v932
      %v934 = vpop.f32.mrb[0].mxu0
      %v935 = vpop.f32.mrb[0].mxu0
      %v936 = vadd.f32 %v859, %v935
      %v937 = vpop.f32.mrb[0].mxu0
      %938 = vmatprep.mubr.bf16.mxu0 0
      %939 = vmatmul.mubr.bf16.gmra.mrb[0].mxu0 %v896
      %v940 = vpop.f32.mrb[0].mxu0
      %v941 = vadd.f32 %v864, %v940
      %v942 = vpop.f32.mrb[0].mxu0
      %v943 = vpop.f32.mrb[0].mxu0
      %v944 = vadd.f32 %v867, %v943
      %v945 = vpop.f32.mrb[0].mxu0
      %946 = vdwg.mxu0
      %v947 = vld [vmem:[%s236] sm:$0xf]
      %v948 = vld [vmem:[%s236 + $0x4] sm:$0xf]
      %v949 = vld [vmem:[%s236 + $0x8] sm:$0xf]
      %v950 = vld [vmem:[%s236 + $0xc] sm:$0xf]
      %s951 = scalar_lea.vmem %s3, 32
      %v952 = vld [vmem:[%s951] sm:$0xf]
      %v953 = vld [vmem:[%s951 + $0x4] sm:$0xf]
      %v954 = vld [vmem:[%s951 + $0x8] sm:$0xf]
      %v955 = vld [vmem:[%s951 + $0xc] sm:$0xf]
      %v960 = vunpack.c.l.b16 %v947
      %v961 = vunpack.c.l.b16 %v948
      %v962 = vunpack.c.l.b16 %v949
      %v963 = vunpack.c.l.b16 %v950
      %v964 = vpack.c.b16 %v961, %v960
      %v965 = vpack.c.b16 %v963, %v962
      %v970 = vunpack.c.l.b16 %v952
      %v971 = vunpack.c.l.b16 %v953
      %v972 = vunpack.c.l.b16 %v954
      %v973 = vunpack.c.l.b16 %v955
      %v974 = vpack.c.b16 %v971, %v970
      %v975 = vpack.c.b16 %v973, %v972
      %v979 = vsel %vm814, %v964, 0
      %v982 = vsel %vm814, %v965, 0
      %984 = vmatprep.subr.bf16.mxu0 0
      %985 = vmatpush1.bf16.msra.mxu0 %v974
      %986 = vmatprep.subr.bf16.mxu0 0
      %987 = vmatpush1.bf16.msra.mxu0 %v975
      %988 = vmatprep.subr.bf16.mxu0 0
      %989 = vmatpush1.bf16.msra.mxu0 0
      %990 = vmatprep.subr.bf16.mxu0 0
      %991 = vmatpush1.bf16.msra.mxu0 0
      %992 = vmatprep.subr.bf16.mxu0 0
      %993 = vmatpush1.bf16.msra.mxu0 0
      %994 = vmatprep.subr.bf16.mxu0 0
      %995 = vmatpush1.bf16.msra.mxu0 0
      %996 = vmatprep.subr.bf16.mxu0 0
      %997 = vmatpush1.bf16.msra.mxu0 0
      %998 = vmatprep.subr.bf16.mxu0 0
      %999 = vmatpush1.bf16.msra.mxu0 0
      %1000 = vmatprep.subr.bf16.mxu0 0
      %1001 = vmatpush1.bf16.msra.mxu0 0
      %1002 = vmatprep.subr.bf16.mxu0 0
      %1003 = vmatpush1.bf16.msra.mxu0 0
      %1004 = vmatprep.subr.bf16.mxu0 0
      %1005 = vmatpush1.bf16.msra.mxu0 0
      %1006 = vmatprep.subr.bf16.mxu0 0
      %1007 = vmatpush1.bf16.msra.mxu0 0
      %1008 = vmatprep.subr.bf16.mxu0 0
      %1009 = vmatpush1.bf16.msra.mxu0 0
      %1010 = vmatprep.subr.bf16.mxu0 0
      %1011 = vmatpush1.bf16.msra.mxu0 0
      %1012 = vmatprep.subr.bf16.mxu0 0
      %1013 = vmatpush1.bf16.msra.mxu0 0
      %1014 = vmatprep.subr.bf16.mxu0 0
      %1015 = vmatpush1.bf16.msra.mxu0 0
      %1016 = vmatprep.mubr.bf16.mxu0 0
      %1017 = vmatmul.mubr.bf16.gmra.mrb[0].mxu0 %v979
      %v1018 = vpop.f32.mrb[0].mxu0
      %v1019 = vadd.f32 0.0, %v1018
      %v1020 = vpop.f32.mrb[0].mxu0
      %v1021 = vpop.f32.mrb[0].mxu0
      %v1022 = vadd.f32 0.0, %v1021
      %v1023 = vpop.f32.mrb[0].mxu0
      %1024 = vmatprep.mubr.bf16.mxu0 0
      %1025 = vmatmul.mubr.bf16.gmra.mrb[0].mxu0 %v982
      %v1026 = vpop.f32.mrb[0].mxu0
      %v1027 = vadd.f32 0.0, %v1026
      %v1028 = vpop.f32.mrb[0].mxu0
      %v1029 = vpop.f32.mrb[0].mxu0
      %v1030 = vadd.f32 0.0, %v1029
      %v1031 = vpop.f32.mrb[0].mxu0
      %1032 = vdwg.mxu0
      %v1033 = vadd.f32 %v933, %v1019
      %v1034 = vadd.f32 %v936, %v1022
      %v1035 = vadd.f32 %v941, %v1027
      %v1036 = vadd.f32 %v944, %v1030
      %v1037 = vld [vmem:[#allocation2 + $0x4] sm:$0xf]
      %v1038 = vld [vmem:[#allocation2 + $0x8] sm:$0xf]
      %v1039 = vld [vmem:[#allocation2 + $0xc] sm:$0xf]
      %v1040 = vld [vmem:[#allocation2 + $0x10] sm:$0xf]
      %s1041 = scalar_lea.vmem %s3, 48
      %v1042 = vld [vmem:[%s1041] sm:$0xf]
      %v1043 = vld [vmem:[%s1041 + $0x4] sm:$0xf]
      %v1044 = vld [vmem:[%s1041 + $0x8] sm:$0xf]
      %v1045 = vld [vmem:[%s1041 + $0xc] sm:$0xf]
      %v1050 = vunpack.c.l.b16 %v1037
      %v1051 = vunpack.c.l.b16 %v1038
      %v1052 = vunpack.c.l.b16 %v1039
      %v1053 = vunpack.c.l.b16 %v1040
      %v1054 = vpack.c.b16 %v1051, %v1050
      %v1055 = vpack.c.b16 %v1053, %v1052
      %v1060 = vunpack.c.l.b16 %v1042
      %v1061 = vunpack.c.l.b16 %v1043
      %v1062 = vunpack.c.l.b16 %v1044
      %v1063 = vunpack.c.l.b16 %v1045
      %v1064 = vpack.c.b16 %v1061, %v1060
      %v1065 = vpack.c.b16 %v1063, %v1062
      %v1069 = vsel %vm814, %v1054, 0
      %v1072 = vsel %vm814, %v1055, 0
      %1074 = vmatprep.subr.bf16.mxu0 0
      %1075 = vmatpush1.bf16.msra.mxu0 %v1064
      %1076 = vmatprep.subr.bf16.mxu0 0
      %1077 = vmatpush1.bf16.msra.mxu0 %v1065
      %1078 = vmatprep.subr.bf16.mxu0 0
      %1079 = vmatpush1.bf16.msra.mxu0 0
      %1080 = vmatprep.subr.bf16.mxu0 0
      %1081 = vmatpush1.bf16.msra.mxu0 0
      %1082 = vmatprep.subr.bf16.mxu0 0
      %1083 = vmatpush1.bf16.msra.mxu0 0
      %1084 = vmatprep.subr.bf16.mxu0 0
      %1085 = vmatpush1.bf16.msra.mxu0 0
      %1086 = vmatprep.subr.bf16.mxu0 0
      %1087 = vmatpush1.bf16.msra.mxu0 0
      %1088 = vmatprep.subr.bf16.mxu0 0
      %1089 = vmatpush1.bf16.msra.mxu0 0
      %1090 = vmatprep.subr.bf16.mxu0 0
      %1091 = vmatpush1.bf16.msra.mxu0 0
      %1092 = vmatprep.subr.bf16.mxu0 0
      %1093 = vmatpush1.bf16.msra.mxu0 0
      %1094 = vmatprep.subr.bf16.mxu0 0
      %1095 = vmatpush1.bf16.msra.mxu0 0
      %1096 = vmatprep.subr.bf16.mxu0 0
      %1097 = vmatpush1.bf16.msra.mxu0 0
      %1098 = vmatprep.subr.bf16.mxu0 0
      %1099 = vmatpush1.bf16.msra.mxu0 0
      %1100 = vmatprep.subr.bf16.mxu0 0
      %1101 = vmatpush1.bf16.msra.mxu0 0
      %1102 = vmatprep.subr.bf16.mxu0 0
      %1103 = vmatpush1.bf16.msra.mxu0 0
      %1104 = vmatprep.subr.bf16.mxu0 0
      %1105 = vmatpush1.bf16.msra.mxu0 0
      %1106 = vmatprep.mubr.bf16.mxu0 0
      %1107 = vmatmul.mubr.bf16.gmra.mrb[0].mxu0 %v1069
      %v1108 = vpop.f32.mrb[0].mxu0
      %v1109 = vadd.f32 0.0, %v1108
      %v1110 = vpop.f32.mrb[0].mxu0
      %v1111 = vpop.f32.mrb[0].mxu0
      %v1112 = vadd.f32 0.0, %v1111
      %v1113 = vpop.f32.mrb[0].mxu0
      %1114 = vmatprep.mubr.bf16.mxu0 0
      %1115 = vmatmul.mubr.bf16.gmra.mrb[0].mxu0 %v1072
      %v1116 = vpop.f32.mrb[0].mxu0
      %v1117 = vadd.f32 0.0, %v1116
      %v1118 = vpop.f32.mrb[0].mxu0
      %v1119 = vpop.f32.mrb[0].mxu0
      %v1120 = vadd.f32 0.0, %v1119
      %v1121 = vpop.f32.mrb[0].mxu0
      %1122 = vdwg.mxu0
      %v1123 = vadd.f32 %v1033, %v1109
      %v1124 = vadd.f32 %v1034, %v1112
      %v1125 = vadd.f32 %v1035, %v1117
      %v1126 = vadd.f32 %v1036, %v1120
      %v1127 = vld [vmem:[%s228 + $0x4] sm:$0xf]
      %v1128 = vld [vmem:[%s228 + $0x8] sm:$0xf]
      %v1129 = vld [vmem:[%s228 + $0xc] sm:$0xf]
      %v1130 = vld [vmem:[%s228 + $0x10] sm:$0xf]
      %s1131 = scalar_lea.vmem %s3, 64
      %v1132 = vld [vmem:[%s1131] sm:$0xf]
      %v1133 = vld [vmem:[%s1131 + $0x4] sm:$0xf]
      %v1134 = vld [vmem:[%s1131 + $0x8] sm:$0xf]
      %v1135 = vld [vmem:[%s1131 + $0xc] sm:$0xf]
      %v1140 = vunpack.c.l.b16 %v1127
      %v1141 = vunpack.c.l.b16 %v1128
      %v1142 = vunpack.c.l.b16 %v1129
      %v1143 = vunpack.c.l.b16 %v1130
      %v1144 = vpack.c.b16 %v1141, %v1140
      %v1145 = vpack.c.b16 %v1143, %v1142
      %v1150 = vunpack.c.l.b16 %v1132
      %v1151 = vunpack.c.l.b16 %v1133
      %v1152 = vunpack.c.l.b16 %v1134
      %v1153 = vunpack.c.l.b16 %v1135
      %v1154 = vpack.c.b16 %v1151, %v1150
      %v1155 = vpack.c.b16 %v1153, %v1152
      %v1159 = vsel %vm814, %v1144, 0
      %v1162 = vsel %vm814, %v1145, 0
      %1164 = vmatprep.subr.bf16.mxu0 0
      %1165 = vmatpush1.bf16.msra.mxu0 %v1154
      %1166 = vmatprep.subr.bf16.mxu0 0
      %1167 = vmatpush1.bf16.msra.mxu0 %v1155
      %1168 = vmatprep.subr.bf16.mxu0 0
      %1169 = vmatpush1.bf16.msra.mxu0 0
      %1170 = vmatprep.subr.bf16.mxu0 0
      %1171 = vmatpush1.bf16.msra.mxu0 0
      %1172 = vmatprep.subr.bf16.mxu0 0
      %1173 = vmatpush1.bf16.msra.mxu0 0
      %1174 = vmatprep.subr.bf16.mxu0 0
      %1175 = vmatpush1.bf16.msra.mxu0 0
      %1176 = vmatprep.subr.bf16.mxu0 0
      %1177 = vmatpush1.bf16.msra.mxu0 0
      %1178 = vmatprep.subr.bf16.mxu0 0
      %1179 = vmatpush1.bf16.msra.mxu0 0
      %1180 = vmatprep.subr.bf16.mxu0 0
      %1181 = vmatpush1.bf16.msra.mxu0 0
      %1182 = vmatprep.subr.bf16.mxu0 0
      %1183 = vmatpush1.bf16.msra.mxu0 0
      %1184 = vmatprep.subr.bf16.mxu0 0
      %1185 = vmatpush1.bf16.msra.mxu0 0
      %1186 = vmatprep.subr.bf16.mxu0 0
      %1187 = vmatpush1.bf16.msra.mxu0 0
      %1188 = vmatprep.subr.bf16.mxu0 0
      %1189 = vmatpush1.bf16.msra.mxu0 0
      %1190 = vmatprep.subr.bf16.mxu0 0
      %1191 = vmatpush1.bf16.msra.mxu0 0
      %1192 = vmatprep.subr.bf16.mxu0 0
      %1193 = vmatpush1.bf16.msra.mxu0 0
      %1194 = vmatprep.subr.bf16.mxu0 0
      %1195 = vmatpush1.bf16.msra.mxu0 0
      %1196 = vmatprep.mubr.bf16.mxu0 0
      %1197 = vmatmul.mubr.bf16.gmra.mrb[0].mxu0 %v1159
      %v1198 = vpop.f32.mrb[0].mxu0
      %v1199 = vadd.f32 0.0, %v1198
      %v1200 = vpop.f32.mrb[0].mxu0
      %v1201 = vpop.f32.mrb[0].mxu0
      %v1202 = vadd.f32 0.0, %v1201
      %v1203 = vpop.f32.mrb[0].mxu0
      %1204 = vmatprep.mubr.bf16.mxu0 0
      %1205 = vmatmul.mubr.bf16.gmra.mrb[0].mxu0 %v1162
      %v1206 = vpop.f32.mrb[0].mxu0
      %v1207 = vadd.f32 0.0, %v1206
      %v1208 = vpop.f32.mrb[0].mxu0
      %v1209 = vpop.f32.mrb[0].mxu0
      %v1210 = vadd.f32 0.0, %v1209
      %v1211 = vpop.f32.mrb[0].mxu0
      %1212 = vdwg.mxu0
      %v1213 = vadd.f32 %v1123, %v1199
      %v1214 = vadd.f32 %v1124, %v1202
      %v1215 = vadd.f32 %v1125, %v1207
      %v1216 = vadd.f32 %v1126, %v1210
      %v1217 = vld [vmem:[%s230 + $0x4] sm:$0xf]
      %v1218 = vld [vmem:[%s230 + $0x8] sm:$0xf]
      %v1219 = vld [vmem:[%s230 + $0xc] sm:$0xf]
      %v1220 = vld [vmem:[%s230 + $0x10] sm:$0xf]
      %s1221 = scalar_lea.vmem %s3, 80
      %v1222 = vld [vmem:[%s1221] sm:$0xf]
      %v1223 = vld [vmem:[%s1221 + $0x4] sm:$0xf]
      %v1224 = vld [vmem:[%s1221 + $0x8] sm:$0xf]
      %v1225 = vld [vmem:[%s1221 + $0xc] sm:$0xf]
      %v1230 = vunpack.c.l.b16 %v1217
      %v1231 = vunpack.c.l.b16 %v1218
      %v1232 = vunpack.c.l.b16 %v1219
      %v1233 = vunpack.c.l.b16 %v1220
      %v1234 = vpack.c.b16 %v1231, %v1230
      %v1235 = vpack.c.b16 %v1233, %v1232
      %v1240 = vunpack.c.l.b16 %v1222
      %v1241 = vunpack.c.l.b16 %v1223
      %v1242 = vunpack.c.l.b16 %v1224
      %v1243 = vunpack.c.l.b16 %v1225
      %v1244 = vpack.c.b16 %v1241, %v1240
      %v1245 = vpack.c.b16 %v1243, %v1242
      %v1249 = vsel %vm814, %v1234, 0
      %v1252 = vsel %vm814, %v1235, 0
      %1254 = vmatprep.subr.bf16.mxu0 0
      %1255 = vmatpush1.bf16.msra.mxu0 %v1244
      %1256 = vmatprep.subr.bf16.mxu0 0
      %1257 = vmatpush1.bf16.msra.mxu0 %v1245
      %1258 = vmatprep.subr.bf16.mxu0 0
      %1259 = vmatpush1.bf16.msra.mxu0 0
      %1260 = vmatprep.subr.bf16.mxu0 0
      %1261 = vmatpush1.bf16.msra.mxu0 0
      %1262 = vmatprep.subr.bf16.mxu0 0
      %1263 = vmatpush1.bf16.msra.mxu0 0
      %1264 = vmatprep.subr.bf16.mxu0 0
      %1265 = vmatpush1.bf16.msra.mxu0 0
      %1266 = vmatprep.subr.bf16.mxu0 0
      %1267 = vmatpush1.bf16.msra.mxu0 0
      %1268 = vmatprep.subr.bf16.mxu0 0
      %1269 = vmatpush1.bf16.msra.mxu0 0
      %1270 = vmatprep.subr.bf16.mxu0 0
      %1271 = vmatpush1.bf16.msra.mxu0 0
      %1272 = vmatprep.subr.bf16.mxu0 0
      %1273 = vmatpush1.bf16.msra.mxu0 0
      %1274 = vmatprep.subr.bf16.mxu0 0
      %1275 = vmatpush1.bf16.msra.mxu0 0
      %1276 = vmatprep.subr.bf16.mxu0 0
      %1277 = vmatpush1.bf16.msra.mxu0 0
      %1278 = vmatprep.subr.bf16.mxu0 0
      %1279 = vmatpush1.bf16.msra.mxu0 0
      %1280 = vmatprep.subr.bf16.mxu0 0
      %1281 = vmatpush1.bf16.msra.mxu0 0
      %1282 = vmatprep.subr.bf16.mxu0 0
      %1283 = vmatpush1.bf16.msra.mxu0 0
      %1284 = vmatprep.subr.bf16.mxu0 0
      %1285 = vmatpush1.bf16.msra.mxu0 0
      %1286 = vmatprep.mubr.bf16.mxu0 0
      %1287 = vmatmul.mubr.bf16.gmra.mrb[0].mxu0 %v1249
      %v1288 = vpop.f32.mrb[0].mxu0
      %v1289 = vadd.f32 0.0, %v1288
      %v1290 = vpop.f32.mrb[0].mxu0
      %v1291 = vpop.f32.mrb[0].mxu0
      %v1292 = vadd.f32 0.0, %v1291
      %v1293 = vpop.f32.mrb[0].mxu0
      %1294 = vmatprep.mubr.bf16.mxu0 0
      %1295 = vmatmul.mubr.bf16.gmra.mrb[0].mxu0 %v1252
      %v1296 = vpop.f32.mrb[0].mxu0
      %v1297 = vadd.f32 0.0, %v1296
      %v1298 = vpop.f32.mrb[0].mxu0
      %v1299 = vpop.f32.mrb[0].mxu0
      %v1300 = vadd.f32 0.0, %v1299
      %v1301 = vpop.f32.mrb[0].mxu0
      %1302 = vdwg.mxu0
      %v1303 = vadd.f32 %v1213, %v1289
      %v1304 = vadd.f32 %v1214, %v1292
      %v1305 = vadd.f32 %v1215, %v1297
      %v1306 = vadd.f32 %v1216, %v1300
      %v1307 = vld [vmem:[%s232 + $0x4] sm:$0xf]
      %v1308 = vld [vmem:[%s232 + $0x8] sm:$0xf]
      %v1309 = vld [vmem:[%s232 + $0xc] sm:$0xf]
      %v1310 = vld [vmem:[%s232 + $0x10] sm:$0xf]
      %s1311 = scalar_lea.vmem %s3, 96
      %v1312 = vld [vmem:[%s1311] sm:$0xf]
      %v1313 = vld [vmem:[%s1311 + $0x4] sm:$0xf]
      %v1314 = vld [vmem:[%s1311 + $0x8] sm:$0xf]
      %v1315 = vld [vmem:[%s1311 + $0xc] sm:$0xf]
      %v1320 = vunpack.c.l.b16 %v1307
      %v1321 = vunpack.c.l.b16 %v1308
      %v1322 = vunpack.c.l.b16 %v1309
      %v1323 = vunpack.c.l.b16 %v1310
      %v1324 = vpack.c.b16 %v1321, %v1320
      %v1325 = vpack.c.b16 %v1323, %v1322
      %v1330 = vunpack.c.l.b16 %v1312
      %v1331 = vunpack.c.l.b16 %v1313
      %v1332 = vunpack.c.l.b16 %v1314
      %v1333 = vunpack.c.l.b16 %v1315
      %v1334 = vpack.c.b16 %v1331, %v1330
      %v1335 = vpack.c.b16 %v1333, %v1332
      %v1339 = vsel %vm814, %v1324, 0
      %v1342 = vsel %vm814, %v1325, 0
      %1344 = vmatprep.subr.bf16.mxu0 0
      %1345 = vmatpush1.bf16.msra.mxu0 %v1334
      %1346 = vmatprep.subr.bf16.mxu0 0
      %1347 = vmatpush1.bf16.msra.mxu0 %v1335
      %1348 = vmatprep.subr.bf16.mxu0 0
      %1349 = vmatpush1.bf16.msra.mxu0 0
      %1350 = vmatprep.subr.bf16.mxu0 0
      %1351 = vmatpush1.bf16.msra.mxu0 0
      %1352 = vmatprep.subr.bf16.mxu0 0
      %1353 = vmatpush1.bf16.msra.mxu0 0
      %1354 = vmatprep.subr.bf16.mxu0 0
      %1355 = vmatpush1.bf16.msra.mxu0 0
      %1356 = vmatprep.subr.bf16.mxu0 0
      %1357 = vmatpush1.bf16.msra.mxu0 0
      %1358 = vmatprep.subr.bf16.mxu0 0
      %1359 = vmatpush1.bf16.msra.mxu0 0
      %1360 = vmatprep.subr.bf16.mxu0 0
      %1361 = vmatpush1.bf16.msra.mxu0 0
      %1362 = vmatprep.subr.bf16.mxu0 0
      %1363 = vmatpush1.bf16.msra.mxu0 0
      %1364 = vmatprep.subr.bf16.mxu0 0
      %1365 = vmatpush1.bf16.msra.mxu0 0
      %1366 = vmatprep.subr.bf16.mxu0 0
      %1367 = vmatpush1.bf16.msra.mxu0 0
      %1368 = vmatprep.subr.bf16.mxu0 0
      %1369 = vmatpush1.bf16.msra.mxu0 0
      %1370 = vmatprep.subr.bf16.mxu0 0
      %1371 = vmatpush1.bf16.msra.mxu0 0
      %1372 = vmatprep.subr.bf16.mxu0 0
      %1373 = vmatpush1.bf16.msra.mxu0 0
      %1374 = vmatprep.subr.bf16.mxu0 0
      %1375 = vmatpush1.bf16.msra.mxu0 0
      %1376 = vmatprep.mubr.bf16.mxu0 0
      %1377 = vmatmul.mubr.bf16.gmra.mrb[0].mxu0 %v1339
      %v1378 = vpop.f32.mrb[0].mxu0
      %v1379 = vadd.f32 0.0, %v1378
      %v1380 = vpop.f32.mrb[0].mxu0
      %v1381 = vpop.f32.mrb[0].mxu0
      %v1382 = vadd.f32 0.0, %v1381
      %v1383 = vpop.f32.mrb[0].mxu0
      %1384 = vmatprep.mubr.bf16.mxu0 0
      %1385 = vmatmul.mubr.bf16.gmra.mrb[0].mxu0 %v1342
      %v1386 = vpop.f32.mrb[0].mxu0
      %v1387 = vadd.f32 0.0, %v1386
      %v1388 = vpop.f32.mrb[0].mxu0
      %v1389 = vpop.f32.mrb[0].mxu0
      %v1390 = vadd.f32 0.0, %v1389
      %v1391 = vpop.f32.mrb[0].mxu0
      %1392 = vdwg.mxu0
      %v1393 = vadd.f32 %v1303, %v1379
      %v1394 = vadd.f32 %v1304, %v1382
      %v1395 = vadd.f32 %v1305, %v1387
      %v1396 = vadd.f32 %v1306, %v1390
      %v1397 = vld [vmem:[%s234 + $0x4] sm:$0xf]
      %v1398 = vld [vmem:[%s234 + $0x8] sm:$0xf]
      %v1399 = vld [vmem:[%s234 + $0xc] sm:$0xf]
      %v1400 = vld [vmem:[%s234 + $0x10] sm:$0xf]
      %s1401 = scalar_lea.vmem %s3, 112
      %v1402 = vld [vmem:[%s1401] sm:$0xf]
      %v1403 = vld [vmem:[%s1401 + $0x4] sm:$0xf]
      %v1404 = vld [vmem:[%s1401 + $0x8] sm:$0xf]
      %v1405 = vld [vmem:[%s1401 + $0xc] sm:$0xf]
      %v1410 = vunpack.c.l.b16 %v1397
      %v1411 = vunpack.c.l.b16 %v1398
      %v1412 = vunpack.c.l.b16 %v1399
      %v1413 = vunpack.c.l.b16 %v1400
      %v1414 = vpack.c.b16 %v1411, %v1410
      %v1415 = vpack.c.b16 %v1413, %v1412
      %v1420 = vunpack.c.l.b16 %v1402
      %v1421 = vunpack.c.l.b16 %v1403
      %v1422 = vunpack.c.l.b16 %v1404
      %v1423 = vunpack.c.l.b16 %v1405
      %v1424 = vpack.c.b16 %v1421, %v1420
      %v1425 = vpack.c.b16 %v1423, %v1422
      %v1429 = vsel %vm814, %v1414, 0
      %v1432 = vsel %vm814, %v1415, 0
      %1434 = vmatprep.subr.bf16.mxu0 0
      %1435 = vmatpush1.bf16.msra.mxu0 %v1424
      %1436 = vmatprep.subr.bf16.mxu0 0
      %1437 = vmatpush1.bf16.msra.mxu0 %v1425
      %1438 = vmatprep.subr.bf16.mxu0 0
      %1439 = vmatpush1.bf16.msra.mxu0 0
      %1440 = vmatprep.subr.bf16.mxu0 0
      %1441 = vmatpush1.bf16.msra.mxu0 0
      %1442 = vmatprep.subr.bf16.mxu0 0
      %1443 = vmatpush1.bf16.msra.mxu0 0
      %1444 = vmatprep.subr.bf16.mxu0 0
      %1445 = vmatpush1.bf16.msra.mxu0 0
      %1446 = vmatprep.subr.bf16.mxu0 0
      %1447 = vmatpush1.bf16.msra.mxu0 0
      %1448 = vmatprep.subr.bf16.mxu0 0
      %1449 = vmatpush1.bf16.msra.mxu0 0
      %1450 = vmatprep.subr.bf16.mxu0 0
      %1451 = vmatpush1.bf16.msra.mxu0 0
      %1452 = vmatprep.subr.bf16.mxu0 0
      %1453 = vmatpush1.bf16.msra.mxu0 0
      %1454 = vmatprep.subr.bf16.mxu0 0
      %1455 = vmatpush1.bf16.msra.mxu0 0
      %1456 = vmatprep.subr.bf16.mxu0 0
      %1457 = vmatpush1.bf16.msra.mxu0 0
      %1458 = vmatprep.subr.bf16.mxu0 0
      %1459 = vmatpush1.bf16.msra.mxu0 0
      %1460 = vmatprep.subr.bf16.mxu0 0
      %1461 = vmatpush1.bf16.msra.mxu0 0
      %1462 = vmatprep.subr.bf16.mxu0 0
      %1463 = vmatpush1.bf16.msra.mxu0 0
      %1464 = vmatprep.subr.bf16.mxu0 0
      %1465 = vmatpush1.bf16.msra.mxu0 0
      %1466 = vmatprep.mubr.bf16.mxu0 0
      %1467 = vmatmul.mubr.bf16.gmra.mrb[0].mxu0 %v1429
      %v1468 = vpop.f32.mrb[0].mxu0
      %v1469 = vadd.f32 0.0, %v1468
      %v1470 = vpop.f32.mrb[0].mxu0
      %v1471 = vpop.f32.mrb[0].mxu0
      %v1472 = vadd.f32 0.0, %v1471
      %v1473 = vpop.f32.mrb[0].mxu0
      %1474 = vmatprep.mubr.bf16.mxu0 0
      %1475 = vmatmul.mubr.bf16.gmra.mrb[0].mxu0 %v1432
      %v1476 = vpop.f32.mrb[0].mxu0
      %v1477 = vadd.f32 0.0, %v1476
      %v1478 = vpop.f32.mrb[0].mxu0
      %v1479 = vpop.f32.mrb[0].mxu0
      %v1480 = vadd.f32 0.0, %v1479
      %v1481 = vpop.f32.mrb[0].mxu0
      %1482 = vdwg.mxu0
      %v1483 = vadd.f32 %v1393, %v1469
      %v1484 = vadd.f32 %v1394, %v1472
      %v1485 = vadd.f32 %v1395, %v1477
      %v1486 = vadd.f32 %v1396, %v1480
      %v1487 = vld [vmem:[%s236 + $0x4] sm:$0xf]
      %v1488 = vld [vmem:[%s236 + $0x8] sm:$0xf]
      %v1489 = vld [vmem:[%s236 + $0xc] sm:$0xf]
      %v1490 = vld [vmem:[%s236 + $0x10] sm:$0xf]
      %s1491 = scalar_lea.vmem %s3, 128
      %v1492 = vld [vmem:[%s1491] sm:$0xf]
      %v1493 = vld [vmem:[%s1491 + $0x4] sm:$0xf]
      %v1494 = vld [vmem:[%s1491 + $0x8] sm:$0xf]
      %v1495 = vld [vmem:[%s1491 + $0xc] sm:$0xf]
      %v1500 = vunpack.c.l.b16 %v1487
      %v1501 = vunpack.c.l.b16 %v1488
      %v1502 = vunpack.c.l.b16 %v1489
      %v1503 = vunpack.c.l.b16 %v1490
      %v1504 = vpack.c.b16 %v1501, %v1500
      %v1505 = vpack.c.b16 %v1503, %v1502
      %v1510 = vunpack.c.l.b16 %v1492
      %v1511 = vunpack.c.l.b16 %v1493
      %v1512 = vunpack.c.l.b16 %v1494
      %v1513 = vunpack.c.l.b16 %v1495
      %v1514 = vpack.c.b16 %v1511, %v1510
      %v1515 = vpack.c.b16 %v1513, %v1512
      %v1519 = vsel %vm814, %v1504, 0
      %v1522 = vsel %vm814, %v1505, 0
      %1524 = vmatprep.subr.bf16.mxu0 0
      %1525 = vmatpush1.bf16.msra.mxu0 %v1514
      %1526 = vmatprep.subr.bf16.mxu0 0
      %1527 = vmatpush1.bf16.msra.mxu0 %v1515
      %1528 = vmatprep.subr.bf16.mxu0 0
      %1529 = vmatpush1.bf16.msra.mxu0 0
      %1530 = vmatprep.subr.bf16.mxu0 0
      %1531 = vmatpush1.bf16.msra.mxu0 0
      %1532 = vmatprep.subr.bf16.mxu0 0
      %1533 = vmatpush1.bf16.msra.mxu0 0
      %1534 = vmatprep.subr.bf16.mxu0 0
      %1535 = vmatpush1.bf16.msra.mxu0 0
      %1536 = vmatprep.subr.bf16.mxu0 0
      %1537 = vmatpush1.bf16.msra.mxu0 0
      %1538 = vmatprep.subr.bf16.mxu0 0
      %1539 = vmatpush1.bf16.msra.mxu0 0
      %1540 = vmatprep.subr.bf16.mxu0 0
      %1541 = vmatpush1.bf16.msra.mxu0 0
      %1542 = vmatprep.subr.bf16.mxu0 0
      %1543 = vmatpush1.bf16.msra.mxu0 0
      %1544 = vmatprep.subr.bf16.mxu0 0
      %1545 = vmatpush1.bf16.msra.mxu0 0
      %1546 = vmatprep.subr.bf16.mxu0 0
      %1547 = vmatpush1.bf16.msra.mxu0 0
      %1548 = vmatprep.subr.bf16.mxu0 0
      %1549 = vmatpush1.bf16.msra.mxu0 0
      %1550 = vmatprep.subr.bf16.mxu0 0
      %1551 = vmatpush1.bf16.msra.mxu0 0
      %1552 = vmatprep.subr.bf16.mxu0 0
      %1553 = vmatpush1.bf16.msra.mxu0 0
      %1554 = vmatprep.subr.bf16.mxu0 0
      %1555 = vmatpush1.bf16.msra.mxu0 0
      %1556 = vmatprep.mubr.bf16.mxu0 0
      %1557 = vmatmul.mubr.bf16.gmra.mrb[0].mxu0 %v1519
      %v1558 = vpop.f32.mrb[0].mxu0
      %v1559 = vadd.f32 0.0, %v1558
      %v1560 = vpop.f32.mrb[0].mxu0
      %v1561 = vpop.f32.mrb[0].mxu0
      %v1562 = vadd.f32 0.0, %v1561
      %v1563 = vpop.f32.mrb[0].mxu0
      %1564 = vmatprep.mubr.bf16.mxu0 0
      %1565 = vmatmul.mubr.bf16.gmra.mrb[0].mxu0 %v1522
      %v1566 = vpop.f32.mrb[0].mxu0
      %v1567 = vadd.f32 0.0, %v1566
      %v1568 = vpop.f32.mrb[0].mxu0
      %v1569 = vpop.f32.mrb[0].mxu0
      %v1570 = vadd.f32 0.0, %v1569
      %v1571 = vpop.f32.mrb[0].mxu0
      %1572 = vdwg.mxu0
      %v1573 = vadd.f32 %v1483, %v1559
      %v1574 = vadd.f32 %v1484, %v1562
      %v1575 = vadd.f32 %v1485, %v1567
      %v1576 = vadd.f32 %v1486, %v1570
      %v1577 = vld [vmem:[%s4] sm:$0x1]
      %v1579 = vlaneseq
      %v1580 = vshrl.u32 %v1579, 7
      %v1581 = vsub.s32 0, %v1580
      %v1582 = vrot.slane %v1577, %v1581
      %v1584 = vadd.f32 %v1573, %v1582
      %v1585 = vadd.f32 %v1574, %v1582
      %v1586 = vadd.f32 %v1575, %v1582
      %v1587 = vadd.f32 %v1576, %v1582
      %v1588 = vmax.f32 %v1584, 0.0
      %v1589 = vmax.f32 %v1585, 0.0
      %v1590 = vmax.f32 %v1586, 0.0
      %v1591 = vmax.f32 %v1587, 0.0
      %vm1592 = vcmask 392192
      %1593 = vst.msk [vmem:[%s224] sm:$0xff] %vm1592, %v1588
      %1594 = vst.msk [vmem:[%s224 + $0x8] sm:$0xff] %vm1592, %v1589
      %1595 = vst.msk [vmem:[%s224 + $0x10] sm:$0xff] %vm1592, %v1590
      %1596 = vst.msk [vmem:[%s224 + $0x18] sm:$0xff] %vm1592, %v1591
      %p1597 = scmp.lt.s32.totalorder %s16, 1
      %s1598 = scalar_select %p1597, %s16, 1
      %s1599 = smul.addr %s1598, 4
      %s1600 = smul.addr %s1599, 8
      %s1601 = scalar_lea.vmem %s5, %s1600
      // Predicated region
      $region41: #{patch_embed_forward.1} parent=39 // pred_check
        %p1602 = pneg %p144
      $region42: #{patch_embed_forward.1} parent=39 // pred_check_branch
        %1604 = sbr.rel (%p1602) target = $region44
      $region43: #{patch_embed_forward.1} parent=39 // pred_region
        _
      $region44: #{patch_embed_forward.1} parent=39 // pred_fallthru
        _
    $region40: #{patch_embed_forward.1} parent=5 // pred_fallthru
      _
    %p1605 = scmp.le.s32.totalorder 2, %s11
    // Predicated region
    $region45: #{patch_embed_forward.1} parent=5 // pred_check
      %p1606 = pneg %p1605
    $region46: #{patch_embed_forward.1} parent=5 // pred_check_branch
      %1608 = sbr.rel (%p1606) target = $region48
    $region47: #{patch_embed_forward.1} parent=5 // pred_region
      %s1609 = ssub.s32 %s11, 2
      // Predicated region
      $region49: #{patch_embed_forward.1} parent=47 // pred_check
        %p1610 = pneg %p150
      $region50: #{patch_embed_forward.1} parent=47 // pred_check_branch
        %1612 = sbr.rel (%p1610) target = $region52
      $region51: #{patch_embed_forward.1} parent=47 // pred_region
        %p1613 = scmp.lt.s32.totalorder %s17, 1
        %s1614 = scalar_select %p1613, %s17, 1
        %s1615 = smul.addr %s1614, 4
        %s1616 = smul.addr %s1615, 8
        %s1617 = scalar_lea.vmem %s5, %s1616
      $region52: #{patch_embed_forward.1} parent=47 // pred_fallthru
        _
    $region48: #{patch_embed_forward.1} parent=5 // pred_fallthru
      _
  $region6: #{patch_embed_forward.1} parent=0 // loop_footer
    %s15 = sadd.s32 1, %s11
  $region7: #{patch_embed_forward.1} parent=0 // loop_footer_branch
    %10 = sbr.rel target = $region3
  $region8: #{patch_embed_forward.1} parent=0 // loop_exit
    _

</llo_original>
